<compile_context>
chip_gen: v6e
topology: v6e:2x2x1
jax: 0.10.0
libtpu: 0.0.40
codegen_flags: <defaults>
</compile_context>

<pallas_src>
import functools

import jax
import jax.numpy as jnp
from jax.experimental import pallas as pl
from jax.experimental.pallas import tpu as pltpu

KERNEL_SIZE = 5
N_GROUPS = 8
GN_EPS = 1e-5


# ----------------------------------------------------------------------------
# in-kernel helpers
# ----------------------------------------------------------------------------
def _mish(x):
    # x * tanh(softplus(x)) with a single transcendental:
    #   tanh(softplus(x)) = n / (n + 2),  n = e^x * (e^x + 2)
    # clamp at 20: tanh(softplus(20)) == 1 in f32, avoids exp overflow.
    e = jnp.exp(jnp.minimum(x, 20.0))
    n = e * (e + 2.0)
    return x * n * pl.reciprocal(n + 2.0, approx=True)


def _group_norm(x, p, gamma, beta):
    # x: [bb, H, C]; p: [C, C] group-average matrix (1/(cpg*H) on same-group
    # entries, precomputed in the wrapper); gamma/beta: [1, 1, C].
    bb, h, c = x.shape
    s = jnp.sum(x, axis=1)                                      # [bb, C]
    mean = jnp.dot(s, p, preferred_element_type=jnp.float32)    # group mean
    xc = x - mean.reshape(bb, 1, c)
    sq = jnp.sum(xc * xc, axis=1)                               # [bb, C]
    var = jnp.dot(sq, p, preferred_element_type=jnp.float32)    # two-pass, >= 0
    inv = jax.lax.rsqrt(var + GN_EPS).reshape(bb, 1, c)
    return xc * inv * gamma + beta


def _resblock_kernel(xcol_ref, xres_ref, tl_ref,
                     w1_ref, b1_ref, g1_ref, be1_ref,
                     w2_ref, b2_ref, g2_ref, be2_ref,
                     p_ref, *rest, k, has_res_conv):
    if has_res_conv:
        wr_ref, br_ref, o_ref, pad_ref = rest
    else:
        o_ref, pad_ref = rest

    bb, h, cout = o_ref.shape
    pad = k // 2

    # ---- Conv1dBlock 0: one im2col matmul -> GroupNorm -> Mish --------------
    h1 = jnp.dot(xcol_ref[...], w1_ref[...],
                 preferred_element_type=jnp.float32) + b1_ref[...]  # [bb*h, C]
    h1 = _mish(_group_norm(h1.reshape(bb, h, cout),
                           p_ref[...], g1_ref[...], be1_ref[...]))

    # ---- + time embedding (hoisted to the wrapper), broadcast over horizon --
    h1 = h1 + tl_ref[...]                                           # [bb, h, C]

    # ---- Conv1dBlock 1: zero-halo scratch + one im2col matmul ---------------
    pad_ref[:, :pad, :] = jnp.zeros((bb, pad, cout), jnp.float32)
    pad_ref[:, pad + h:, :] = jnp.zeros((bb, pad, cout), jnp.float32)
    pad_ref[:, pad:pad + h, :] = h1
    acol = jnp.concatenate([pad_ref[:, tap:tap + h, :] for tap in range(k)],
                           axis=-1)                                 # [bb,h,k*C]
    h2 = jnp.dot(acol.reshape(bb * h, k * cout).astype(jnp.bfloat16),
                 w2_ref[...],
                 preferred_element_type=jnp.float32) + b2_ref[...]  # [bb*h, C]
    h2 = _mish(_group_norm(h2.reshape(bb, h, cout),
                           p_ref[...], g2_ref[...], be2_ref[...]))

    # ---- residual path -------------------------------------------------------
    if has_res_conv:
        res = jnp.dot(xres_ref[...], wr_ref[...],
                      preferred_element_type=jnp.float32) + br_ref[...]
    else:
        res = xres_ref[...].astype(jnp.float32)      # nn.Identity()
    o_ref[...] = (h2 + res.reshape(bb, h, cout)).astype(o_ref.dtype)


# ----------------------------------------------------------------------------
# wrapper
# ----------------------------------------------------------------------------
def _pick_batch_block(b, h):
    # Whole batch resident (grid collapses) when small; otherwise the smallest
    # batch block giving >=256 token rows per step with sublane-aligned blocks.
    if b * h <= 512:
        return b
    for cand in range(1, b + 1):
        if b % cand == 0 and cand * h >= 256 and (cand * h) % 8 == 0:
            return cand
    return b


def residual_temporal_block(x, t, params):
    """x: [B, Cin, H], t: [B, E]  ->  [B, Cout, H]."""
    b, cin, h = x.shape
    k, cout, _ = params["w1"].shape
    pad = k // 2
    has_res_conv = (cin != cout)
    assert cout % N_GROUPS == 0
    cpg = cout // N_GROUPS

    bb = _pick_batch_block(b, h)
    grid = (b // bb,)

    f32, bf16 = jnp.float32, jnp.bfloat16

    # -- hoisted time MLP: Mish -> Linear, one batched matmul (XLA side) ------
    th = t * jnp.tanh(jax.nn.softplus(t))
    tl = th @ params["wt"].T + params["bt"][:, 0][None, :]           # [B, C]
    tl3 = tl[:, None, :].astype(f32)                                 # [B, 1, C]

    # -- token-major im2col of x for conv1: [B*H, K*Cin] (pre-padded once) ----
    xp = jnp.pad(x, ((0, 0), (0, 0), (pad, pad)))                    # [B,Cin,H+2p]
    cols = jnp.stack([xp[:, :, i:i + h] for i in range(k)], axis=1)  # [B,K,Cin,H]
    xcol = jnp.transpose(cols, (0, 3, 1, 2)).reshape(b * h, k * cin).astype(bf16)

    # -- residual input, token-major ------------------------------------------
    xres = jnp.transpose(x, (0, 2, 1)).reshape(b * h, cin)
    xres = xres.astype(bf16) if has_res_conv else xres.astype(f32)

    # -- weights/params reshaped for the token layout --------------------------
    w1col = jnp.transpose(params["w1"], (0, 2, 1)).reshape(k * cin, cout).astype(bf16)
    w2col = jnp.transpose(params["w2"], (0, 2, 1)).reshape(k * cout, cout).astype(bf16)
    b1r = params["b1"].reshape(1, cout).astype(f32)
    b2r = params["b2"].reshape(1, cout).astype(f32)
    g1r = params["g1"].reshape(1, 1, cout).astype(f32)
    be1r = params["be1"].reshape(1, 1, cout).astype(f32)
    g2r = params["g2"].reshape(1, 1, cout).astype(f32)
    be2r = params["be2"].reshape(1, 1, cout).astype(f32)

    # -- precomputed GroupNorm group-average matrix ----------------------------
    gid = jnp.arange(cout) // cpg
    p_mat = (gid[:, None] == gid[None, :]).astype(f32) / float(cpg * h)

    def full2(a):
        return pl.BlockSpec(a.shape, lambda i: (0, 0))

    def full3(a):
        return pl.BlockSpec(a.shape, lambda i: (0, 0, 0))

    in_arrays = [xcol, xres, tl3, w1col, b1r, g1r, be1r,
                 w2col, b2r, g2r, be2r, p_mat]
    in_specs = [
        pl.BlockSpec((bb * h, k * cin), lambda i: (i, 0)),
        pl.BlockSpec((bb * h, cin), lambda i: (i, 0)),
        pl.BlockSpec((bb, 1, cout), lambda i: (i, 0, 0)),
        full2(w1col), full2(b1r), full3(g1r), full3(be1r),
        full2(w2col), full2(b2r), full3(g2r), full3(be2r),
        full2(p_mat),
    ]
    if has_res_conv:
        wr_t = params["wr"].T.astype(bf16)                           # [Cin, C]
        br_r = params["br"].reshape(1, cout).astype(f32)
        in_arrays += [wr_t, br_r]
        in_specs += [full2(wr_t), full2(br_r)]

    kernel = functools.partial(_resblock_kernel, k=k, has_res_conv=has_res_conv)

    out_thc = pl.pallas_call(
        kernel,
        out_shape=jax.ShapeDtypeStruct((b, h, cout), x.dtype),
        grid_spec=pltpu.PrefetchScalarGridSpec(
            num_scalar_prefetch=0,
            grid=grid,
            in_specs=in_specs,
            out_specs=pl.BlockSpec((bb, h, cout), lambda i: (i, 0, 0)),
            scratch_shapes=[pltpu.VMEM((bb, h + 2 * pad, cout), jnp.float32)],
        ),
        compiler_params=pltpu.CompilerParams(
            dimension_semantics=("parallel",),       # batch steps independent
            vmem_limit_bytes=64 * 1024 * 1024,       # retune for v7x at big C/H
        ),
    )(*in_arrays)

    return jnp.transpose(out_thc, (0, 2, 1))          # [B, Cout, H]


# ----------------------------------------------------------------------------
# params / pure-JAX reference
# ----------------------------------------------------------------------------
def init_params(key, cin, cout, e, k=KERNEL_SIZE):
    keys = jax.random.split(key, 8)
    s = 0.1
    params = dict(
        w1=jax.random.normal(keys[0], (k, cout, cin), jnp.float32) * s,
        b1=jax.random.normal(keys[1], (cout, 1), jnp.float32) * s,
        g1=jnp.ones((cout, 1), jnp.float32),
        be1=jnp.zeros((cout, 1), jnp.float32),
        w2=jax.random.normal(keys[2], (k, cout, cout), jnp.float32) * s,
        b2=jax.random.normal(keys[3], (cout, 1), jnp.float32) * s,
        g2=jnp.ones((cout, 1), jnp.float32),
        be2=jnp.zeros((cout, 1), jnp.float32),
        wt=jax.random.normal(keys[4], (cout, e), jnp.float32) * s,
        bt=jax.random.normal(keys[5], (cout, 1), jnp.float32) * s,
    )
    if cin != cout:
        params["wr"] = jax.random.normal(keys[6], (cout, cin), jnp.float32) * s
        params["br"] = jax.random.normal(keys[7], (cout, 1), jnp.float32) * s
    else:
        params["wr"] = jnp.eye(cout, dtype=jnp.float32)   # nn.Identity()
        params["br"] = jnp.zeros((cout, 1), jnp.float32)
    return params


def reference(x, t, p):
    """Pure-JAX reference (XLA convs) for the correctness check."""
    def conv(xx, w, bb):
        w_oik = jnp.transpose(w, (1, 2, 0))  # [Cout, Cin, K]
        y = jax.lax.conv_general_dilated(
            xx, w_oik, window_strides=(1,),
            padding=((KERNEL_SIZE // 2, KERNEL_SIZE // 2),),
            dimension_numbers=("NCH", "OIH", "NCH"))
        return y + bb[None, :, :]

    def gn(xx, gamma, beta):
        b_, c_, h_ = xx.shape
        g = xx.reshape(b_, N_GROUPS, c_ // N_GROUPS, h_)
        mean = g.mean(axis=(2, 3), keepdims=True)
        var = g.var(axis=(2, 3), keepdims=True)
        g = (g - mean) / jnp.sqrt(var + GN_EPS)
        return g.reshape(b_, c_, h_) * gamma[None] + beta[None]

    def mish(v):
        return v * jnp.tanh(jax.nn.softplus(v))

    h1 = mish(gn(conv(x, p["w1"], p["b1"]), p["g1"], p["be1"]))
    tl = mish(t) @ p["wt"].T + p["bt"][:, 0][None, :]
    out = h1 + tl[:, :, None]
    h2 = mish(gn(conv(out, p["w2"], p["b2"]), p["g2"], p["be2"]))
    res = jnp.einsum("oc,bch->boh", p["wr"], x) + p["br"][None]
    return h2 + res


if __name__ == "__main__":
    B, CIN, COUT, EMBED, HORIZON = 2, 4, 32, 32, 16
    key = jax.random.PRNGKey(0)
    kx, kt, kp = jax.random.split(key, 3)
    x = jax.random.normal(kx, (B, CIN, HORIZON), jnp.float32)
    t = jax.random.normal(kt, (B, EMBED), jnp.float32)
    params = init_params(kp, CIN, COUT, EMBED)

    out = jax.block_until_ready(residual_temporal_block(x, t, params))
    ref = reference(x, t, params)
    assert out.shape == (B, COUT, HORIZON)
    # tolerance accounts for bf16 MXU operands + approx EUP reciprocal
    assert jnp.allclose(out, ref, rtol=3e-2, atol=3e-2), \
        float(jnp.max(jnp.abs(out - ref)))

    # identity-residual path (cin == cout -> nn.Identity, 1x1 conv skipped)
    x2 = jax.random.normal(kx, (B, COUT, HORIZON), jnp.float32)
    params2 = init_params(kp, COUT, COUT, EMBED)
    out2 = jax.block_until_ready(residual_temporal_block(x2, t, params2))
    ref2 = reference(x2, t, params2)
    assert out2.shape == (B, COUT, HORIZON)
    assert jnp.allclose(out2, ref2, rtol=3e-2, atol=3e-2), \
        float(jnp.max(jnp.abs(out2 - ref2)))

    print("KERNEL_OK")
</pallas_src>

<mosaic_0001>
module attributes {stable_mosaic.version = 11 : i64} {
  func.func @_resblock_kernel(%arg0: i32, %arg1: memref<32x20xbf16, #tpu.memory_space<vmem>>, %arg2: memref<32x4xbf16, #tpu.memory_space<vmem>>, %arg3: memref<2x1x32xf32, #tpu.memory_space<vmem>>, %arg4: memref<20x32xbf16, #tpu.memory_space<vmem>>, %arg5: memref<1x32xf32, #tpu.memory_space<vmem>>, %arg6: memref<1x1x32xf32, #tpu.memory_space<vmem>>, %arg7: memref<1x1x32xf32, #tpu.memory_space<vmem>>, %arg8: memref<160x32xbf16, #tpu.memory_space<vmem>>, %arg9: memref<1x32xf32, #tpu.memory_space<vmem>>, %arg10: memref<1x1x32xf32, #tpu.memory_space<vmem>>, %arg11: memref<1x1x32xf32, #tpu.memory_space<vmem>>, %arg12: memref<32x32xf32, #tpu.memory_space<vmem>>, %arg13: memref<4x32xbf16, #tpu.memory_space<vmem>>, %arg14: memref<1x32xf32, #tpu.memory_space<vmem>>, %arg15: memref<2x16x32xf32, #tpu.memory_space<vmem>>, %arg16: memref<2x20x32xf32, #tpu.memory_space<vmem>>) attributes {dimension_semantics = [#tpu.dimension_semantics<parallel>], iteration_bounds = array<i64: 1>, scalar_prefetch = 0 : i64, scratch_operands = 1 : i64, tpu.core_type = #tpu.core_type<tc>, window_params = [{transform_indices = @transform_0, window_bounds = array<i64: 32, 20>}, {transform_indices = @transform_1, window_bounds = array<i64: 32, 4>}, {transform_indices = @transform_2, window_bounds = array<i64: 2, 1, 32>}, {pipeline_mode = #tpu.pipeline_mode<synchronous>, transform_indices = @transform_3, window_bounds = array<i64: 20, 32>}, {pipeline_mode = #tpu.pipeline_mode<synchronous>, transform_indices = @transform_4, window_bounds = array<i64: 1, 32>}, {pipeline_mode = #tpu.pipeline_mode<synchronous>, transform_indices = @transform_5, window_bounds = array<i64: 1, 1, 32>}, {pipeline_mode = #tpu.pipeline_mode<synchronous>, transform_indices = @transform_6, window_bounds = array<i64: 1, 1, 32>}, {pipeline_mode = #tpu.pipeline_mode<synchronous>, transform_indices = @transform_7, window_bounds = array<i64: 160, 32>}, {pipeline_mode = #tpu.pipeline_mode<synchronous>, transform_indices = @transform_8, window_bounds = array<i64: 1, 32>}, {pipeline_mode = #tpu.pipeline_mode<synchronous>, transform_indices = @transform_9, window_bounds = array<i64: 1, 1, 32>}, {pipeline_mode = #tpu.pipeline_mode<synchronous>, transform_indices = @transform_10, window_bounds = array<i64: 1, 1, 32>}, {pipeline_mode = #tpu.pipeline_mode<synchronous>, transform_indices = @transform_11, window_bounds = array<i64: 32, 32>}, {pipeline_mode = #tpu.pipeline_mode<synchronous>, transform_indices = @transform_12, window_bounds = array<i64: 4, 32>}, {pipeline_mode = #tpu.pipeline_mode<synchronous>, transform_indices = @transform_13, window_bounds = array<i64: 1, 32>}, {transform_indices = @transform_14, window_bounds = array<i64: 2, 16, 32>}]} {
    %c0 = arith.constant 0 : index
    %c0_0 = arith.constant 0 : index
    %0 = vector.load %arg1[%c0, %c0_0] : memref<32x20xbf16, #tpu.memory_space<vmem>>, vector<32x20xbf16>
    %c0_1 = arith.constant 0 : index
    %c0_2 = arith.constant 0 : index
    %1 = vector.load %arg4[%c0_1, %c0_2] : memref<20x32xbf16, #tpu.memory_space<vmem>>, vector<20x32xbf16>
    %cst = arith.constant dense<0.000000e+00> : vector<32x32xf32>
    %2 = tpu.matmul %0, %1, %cst {dimension_numbers = #tpu.dot_dimension_numbers<[1], [0], [0], [1], [0, 0, 1, 1], [], []>} : vector<32x20xbf16>, vector<20x32xbf16>, vector<32x32xf32> -> vector<32x32xf32>
    %c0_3 = arith.constant 0 : index
    %c0_4 = arith.constant 0 : index
    %3 = vector.load %arg5[%c0_3, %c0_4] : memref<1x32xf32, #tpu.memory_space<vmem>>, vector<1x32xf32>
    %4 = vector.broadcast %3 : vector<1x32xf32> to vector<32x32xf32>
    %5 = arith.addf %2, %4 : vector<32x32xf32>
    %6 = vector.shape_cast %5 : vector<32x32xf32> to vector<2x16x32xf32>
    %c0_5 = arith.constant 0 : index
    %c0_6 = arith.constant 0 : index
    %7 = vector.load %arg12[%c0_5, %c0_6] : memref<32x32xf32, #tpu.memory_space<vmem>>, vector<32x32xf32>
    %c0_7 = arith.constant 0 : index
    %c0_8 = arith.constant 0 : index
    %c0_9 = arith.constant 0 : index
    %8 = vector.load %arg6[%c0_7, %c0_8, %c0_9] : memref<1x1x32xf32, #tpu.memory_space<vmem>>, vector<1x1x32xf32>
    %c0_10 = arith.constant 0 : index
    %c0_11 = arith.constant 0 : index
    %c0_12 = arith.constant 0 : index
    %9 = vector.load %arg7[%c0_10, %c0_11, %c0_12] : memref<1x1x32xf32, #tpu.memory_space<vmem>>, vector<1x1x32xf32>
    %cst_13 = arith.constant dense<0.000000e+00> : vector<2x32xf32>
    %10 = vector.multi_reduction <add>, %6, %cst_13 [1] : vector<2x16x32xf32> to vector<2x32xf32>
    %cst_14 = arith.constant dense<0.000000e+00> : vector<2x32xf32>
    %11 = tpu.matmul %10, %7, %cst_14 {dimension_numbers = #tpu.dot_dimension_numbers<[1], [0], [0], [1], [0, 0, 1, 1], [], []>} : vector<2x32xf32>, vector<32x32xf32>, vector<2x32xf32> -> vector<2x32xf32>
    %12 = vector.shape_cast %11 : vector<2x32xf32> to vector<2x1x32xf32>
    %13 = vector.broadcast %12 : vector<2x1x32xf32> to vector<2x16x32xf32>
    %14 = arith.subf %6, %13 : vector<2x16x32xf32>
    %15 = arith.mulf %14, %14 : vector<2x16x32xf32>
    %cst_15 = arith.constant dense<0.000000e+00> : vector<2x32xf32>
    %16 = vector.multi_reduction <add>, %15, %cst_15 [1] : vector<2x16x32xf32> to vector<2x32xf32>
    %cst_16 = arith.constant dense<0.000000e+00> : vector<2x32xf32>
    %17 = tpu.matmul %16, %7, %cst_16 {dimension_numbers = #tpu.dot_dimension_numbers<[1], [0], [0], [1], [0, 0, 1, 1], [], []>} : vector<2x32xf32>, vector<32x32xf32>, vector<2x32xf32> -> vector<2x32xf32>
    %cst_17 = arith.constant 9.99999974E-6 : f32
    %18 = vector.broadcast %cst_17 : f32 to vector<2x32xf32>
    %19 = arith.addf %17, %18 : vector<2x32xf32>
    %20 = math.rsqrt %19 : vector<2x32xf32>
    %21 = vector.shape_cast %20 : vector<2x32xf32> to vector<2x1x32xf32>
    %22 = vector.broadcast %21 : vector<2x1x32xf32> to vector<2x16x32xf32>
    %23 = arith.mulf %14, %22 : vector<2x16x32xf32>
    %24 = vector.broadcast %8 : vector<1x1x32xf32> to vector<2x16x32xf32>
    %25 = arith.mulf %23, %24 : vector<2x16x32xf32>
    %26 = vector.broadcast %9 : vector<1x1x32xf32> to vector<2x16x32xf32>
    %27 = arith.addf %25, %26 : vector<2x16x32xf32>
    %cst_18 = arith.constant 2.000000e+01 : f32
    %28 = vector.broadcast %cst_18 : f32 to vector<2x16x32xf32>
    %29 = arith.minimumf %27, %28 : vector<2x16x32xf32>
    %30 = math.exp %29 : vector<2x16x32xf32>
    %cst_19 = arith.constant 2.000000e+00 : f32
    %31 = vector.broadcast %cst_19 : f32 to vector<2x16x32xf32>
    %32 = arith.addf %30, %31 : vector<2x16x32xf32>
    %33 = arith.mulf %30, %32 : vector<2x16x32xf32>
    %34 = arith.mulf %27, %33 : vector<2x16x32xf32>
    %cst_20 = arith.constant 2.000000e+00 : f32
    %35 = vector.broadcast %cst_20 : f32 to vector<2x16x32xf32>
    %36 = arith.addf %33, %35 : vector<2x16x32xf32>
    %37 = tpu.reciprocal %36 {approx = true} : vector<2x16x32xf32> -> vector<2x16x32xf32>
    %38 = arith.mulf %34, %37 : vector<2x16x32xf32>
    %c0_21 = arith.constant 0 : index
    %c0_22 = arith.constant 0 : index
    %c0_23 = arith.constant 0 : index
    %39 = vector.load %arg3[%c0_21, %c0_22, %c0_23] : memref<2x1x32xf32, #tpu.memory_space<vmem>>, vector<2x1x32xf32>
    %40 = vector.broadcast %39 : vector<2x1x32xf32> to vector<2x16x32xf32>
    %41 = arith.addf %38, %40 : vector<2x16x32xf32>
    %cst_24 = arith.constant 0.000000e+00 : f32
    %42 = vector.broadcast %cst_24 : f32 to vector<2x2x32xf32>
    %c0_25 = arith.constant 0 : index
    %c0_26 = arith.constant 0 : index
    %c0_27 = arith.constant 0 : index
    %43 = vector.load %arg16[%c0_25, %c0_26, %c0_27] : memref<2x20x32xf32, #tpu.memory_space<vmem>>, vector<2x2x32xf32>
    tpu.vector_store %arg16[%c0_25, %c0_26, %c0_27], %42 {strides = array<i32>} : memref<2x20x32xf32, #tpu.memory_space<vmem>>, vector<2x2x32xf32>,
    %cst_28 = arith.constant 0.000000e+00 : f32
    %44 = vector.broadcast %cst_28 : f32 to vector<2x2x32xf32>
    %c0_29 = arith.constant 0 : index
    %c18 = arith.constant 18 : index
    %c0_30 = arith.constant 0 : index
    %45 = vector.load %arg16[%c0_29, %c18, %c0_30] : memref<2x20x32xf32, #tpu.memory_space<vmem>>, vector<2x2x32xf32>
    tpu.vector_store %arg16[%c0_29, %c18, %c0_30], %44 {strides = array<i32>} : memref<2x20x32xf32, #tpu.memory_space<vmem>>, vector<2x2x32xf32>,
    %c0_31 = arith.constant 0 : index
    %c2 = arith.constant 2 : index
    %c0_32 = arith.constant 0 : index
    %46 = vector.load %arg16[%c0_31, %c2, %c0_32] : memref<2x20x32xf32, #tpu.memory_space<vmem>>, vector<2x16x32xf32>
    tpu.vector_store %arg16[%c0_31, %c2, %c0_32], %41 {strides = array<i32>} : memref<2x20x32xf32, #tpu.memory_space<vmem>>, vector<2x16x32xf32>,
    %c0_33 = arith.constant 0 : index
    %c0_34 = arith.constant 0 : index
    %c0_35 = arith.constant 0 : index
    %47 = vector.load %arg16[%c0_33, %c0_34, %c0_35] : memref<2x20x32xf32, #tpu.memory_space<vmem>>, vector<2x16x32xf32>
    %c0_36 = arith.constant 0 : index
    %c1 = arith.constant 1 : index
    %c0_37 = arith.constant 0 : index
    %48 = vector.load %arg16[%c0_36, %c1, %c0_37] : memref<2x20x32xf32, #tpu.memory_space<vmem>>, vector<2x16x32xf32>
    %c0_38 = arith.constant 0 : index
    %c2_39 = arith.constant 2 : index
    %c0_40 = arith.constant 0 : index
    %49 = vector.load %arg16[%c0_38, %c2_39, %c0_40] : memref<2x20x32xf32, #tpu.memory_space<vmem>>, vector<2x16x32xf32>
    %c0_41 = arith.constant 0 : index
    %c3 = arith.constant 3 : index
    %c0_42 = arith.constant 0 : index
    %50 = vector.load %arg16[%c0_41, %c3, %c0_42] : memref<2x20x32xf32, #tpu.memory_space<vmem>>, vector<2x16x32xf32>
    %c0_43 = arith.constant 0 : index
    %c4 = arith.constant 4 : index
    %c0_44 = arith.constant 0 : index
    %51 = vector.load %arg16[%c0_43, %c4, %c0_44] : memref<2x20x32xf32, #tpu.memory_space<vmem>>, vector<2x16x32xf32>
    %52 = tpu.concatenate %47, %48, %49, %50, %51 in 2 : vector<2x16x32xf32>, vector<2x16x32xf32>, vector<2x16x32xf32>, vector<2x16x32xf32>, vector<2x16x32xf32> -> vector<2x16x160xf32>
    %53 = vector.shape_cast %52 : vector<2x16x160xf32> to vector<32x160xf32>
    %54 = arith.truncf %53 : vector<32x160xf32> to vector<32x160xbf16>
    %c0_45 = arith.constant 0 : index
    %c0_46 = arith.constant 0 : index
    %55 = vector.load %arg8[%c0_45, %c0_46] : memref<160x32xbf16, #tpu.memory_space<vmem>>, vector<160x32xbf16>
    %cst_47 = arith.constant dense<0.000000e+00> : vector<32x32xf32>
    %56 = tpu.matmul %54, %55, %cst_47 {dimension_numbers = #tpu.dot_dimension_numbers<[1], [0], [0], [1], [0, 0, 1, 1], [], []>} : vector<32x160xbf16>, vector<160x32xbf16>, vector<32x32xf32> -> vector<32x32xf32>
    %c0_48 = arith.constant 0 : index
    %c0_49 = arith.constant 0 : index
    %57 = vector.load %arg9[%c0_48, %c0_49] : memref<1x32xf32, #tpu.memory_space<vmem>>, vector<1x32xf32>
    %58 = vector.broadcast %57 : vector<1x32xf32> to vector<32x32xf32>
    %59 = arith.addf %56, %58 : vector<32x32xf32>
    %60 = vector.shape_cast %59 : vector<32x32xf32> to vector<2x16x32xf32>
    %c0_50 = arith.constant 0 : index
    %c0_51 = arith.constant 0 : index
    %61 = vector.load %arg12[%c0_50, %c0_51] : memref<32x32xf32, #tpu.memory_space<vmem>>, vector<32x32xf32>
    %c0_52 = arith.constant 0 : index
    %c0_53 = arith.constant 0 : index
    %c0_54 = arith.constant 0 : index
    %62 = vector.load %arg10[%c0_52, %c0_53, %c0_54] : memref<1x1x32xf32, #tpu.memory_space<vmem>>, vector<1x1x32xf32>
    %c0_55 = arith.constant 0 : index
    %c0_56 = arith.constant 0 : index
    %c0_57 = arith.constant 0 : index
    %63 = vector.load %arg11[%c0_55, %c0_56, %c0_57] : memref<1x1x32xf32, #tpu.memory_space<vmem>>, vector<1x1x32xf32>
    %cst_58 = arith.constant dense<0.000000e+00> : vector<2x32xf32>
    %64 = vector.multi_reduction <add>, %60, %cst_58 [1] : vector<2x16x32xf32> to vector<2x32xf32>
    %cst_59 = arith.constant dense<0.000000e+00> : vector<2x32xf32>
    %65 = tpu.matmul %64, %61, %cst_59 {dimension_numbers = #tpu.dot_dimension_numbers<[1], [0], [0], [1], [0, 0, 1, 1], [], []>} : vector<2x32xf32>, vector<32x32xf32>, vector<2x32xf32> -> vector<2x32xf32>
    %66 = vector.shape_cast %65 : vector<2x32xf32> to vector<2x1x32xf32>
    %67 = vector.broadcast %66 : vector<2x1x32xf32> to vector<2x16x32xf32>
    %68 = arith.subf %60, %67 : vector<2x16x32xf32>
    %69 = arith.mulf %68, %68 : vector<2x16x32xf32>
    %cst_60 = arith.constant dense<0.000000e+00> : vector<2x32xf32>
    %70 = vector.multi_reduction <add>, %69, %cst_60 [1] : vector<2x16x32xf32> to vector<2x32xf32>
    %cst_61 = arith.constant dense<0.000000e+00> : vector<2x32xf32>
    %71 = tpu.matmul %70, %61, %cst_61 {dimension_numbers = #tpu.dot_dimension_numbers<[1], [0], [0], [1], [0, 0, 1, 1], [], []>} : vector<2x32xf32>, vector<32x32xf32>, vector<2x32xf32> -> vector<2x32xf32>
    %cst_62 = arith.constant 9.99999974E-6 : f32
    %72 = vector.broadcast %cst_62 : f32 to vector<2x32xf32>
    %73 = arith.addf %71, %72 : vector<2x32xf32>
    %74 = math.rsqrt %73 : vector<2x32xf32>
    %75 = vector.shape_cast %74 : vector<2x32xf32> to vector<2x1x32xf32>
    %76 = vector.broadcast %75 : vector<2x1x32xf32> to vector<2x16x32xf32>
    %77 = arith.mulf %68, %76 : vector<2x16x32xf32>
    %78 = vector.broadcast %62 : vector<1x1x32xf32> to vector<2x16x32xf32>
    %79 = arith.mulf %77, %78 : vector<2x16x32xf32>
    %80 = vector.broadcast %63 : vector<1x1x32xf32> to vector<2x16x32xf32>
    %81 = arith.addf %79, %80 : vector<2x16x32xf32>
    %cst_63 = arith.constant 2.000000e+01 : f32
    %82 = vector.broadcast %cst_63 : f32 to vector<2x16x32xf32>
    %83 = arith.minimumf %81, %82 : vector<2x16x32xf32>
    %84 = math.exp %83 : vector<2x16x32xf32>
    %cst_64 = arith.constant 2.000000e+00 : f32
    %85 = vector.broadcast %cst_64 : f32 to vector<2x16x32xf32>
    %86 = arith.addf %84, %85 : vector<2x16x32xf32>
    %87 = arith.mulf %84, %86 : vector<2x16x32xf32>
    %88 = arith.mulf %81, %87 : vector<2x16x32xf32>
    %cst_65 = arith.constant 2.000000e+00 : f32
    %89 = vector.broadcast %cst_65 : f32 to vector<2x16x32xf32>
    %90 = arith.addf %87, %89 : vector<2x16x32xf32>
    %91 = tpu.reciprocal %90 {approx = true} : vector<2x16x32xf32> -> vector<2x16x32xf32>
    %92 = arith.mulf %88, %91 : vector<2x16x32xf32>
    %c0_66 = arith.constant 0 : index
    %c0_67 = arith.constant 0 : index
    %93 = vector.load %arg2[%c0_66, %c0_67] : memref<32x4xbf16, #tpu.memory_space<vmem>>, vector<32x4xbf16>
    %c0_68 = arith.constant 0 : index
    %c0_69 = arith.constant 0 : index
    %94 = vector.load %arg13[%c0_68, %c0_69] : memref<4x32xbf16, #tpu.memory_space<vmem>>, vector<4x32xbf16>
    %cst_70 = arith.constant dense<0.000000e+00> : vector<32x32xf32>
    %95 = tpu.matmul %93, %94, %cst_70 {dimension_numbers = #tpu.dot_dimension_numbers<[1], [0], [0], [1], [0, 0, 1, 1], [], []>} : vector<32x4xbf16>, vector<4x32xbf16>, vector<32x32xf32> -> vector<32x32xf32>
    %c0_71 = arith.constant 0 : index
    %c0_72 = arith.constant 0 : index
    %96 = vector.load %arg14[%c0_71, %c0_72] : memref<1x32xf32, #tpu.memory_space<vmem>>, vector<1x32xf32>
    %97 = vector.broadcast %96 : vector<1x32xf32> to vector<32x32xf32>
    %98 = arith.addf %95, %97 : vector<32x32xf32>
    %99 = vector.shape_cast %98 : vector<32x32xf32> to vector<2x16x32xf32>
    %100 = arith.addf %92, %99 : vector<2x16x32xf32>
    %c0_73 = arith.constant 0 : index
    %c0_74 = arith.constant 0 : index
    %c0_75 = arith.constant 0 : index
    %101 = vector.load %arg15[%c0_73, %c0_74, %c0_75] : memref<2x16x32xf32, #tpu.memory_space<vmem>>, vector<2x16x32xf32>
    tpu.vector_store %arg15[%c0_73, %c0_74, %c0_75], %100 {strides = array<i32>} : memref<2x16x32xf32, #tpu.memory_space<vmem>>, vector<2x16x32xf32>,
    return
  }
  func.func @transform_0(%arg0: i32) -> (i32, i32) {
    %c0_i32 = arith.constant 0 : i32
    %c0_i32_0 = arith.constant 0 : i32
    return %arg0, %c0_i32 : i32, i32
  }
  func.func @transform_1(%arg0: i32) -> (i32, i32) {
    %c0_i32 = arith.constant 0 : i32
    %c0_i32_0 = arith.constant 0 : i32
    return %arg0, %c0_i32 : i32, i32
  }
  func.func @transform_2(%arg0: i32) -> (i32, i32, i32) {
    %c0_i32 = arith.constant 0 : i32
    %c0_i32_0 = arith.constant 0 : i32
    %c0_i32_1 = arith.constant 0 : i32
    return %arg0, %c0_i32, %c0_i32_0 : i32, i32, i32
  }
  func.func @transform_3(%arg0: i32) -> (i32, i32) {
    %c0_i32 = arith.constant 0 : i32
    %c0_i32_0 = arith.constant 0 : i32
    %c0_i32_1 = arith.constant 0 : i32
    return %c0_i32, %c0_i32_0 : i32, i32
  }
  func.func @transform_4(%arg0: i32) -> (i32, i32) {
    %c0_i32 = arith.constant 0 : i32
    %c0_i32_0 = arith.constant 0 : i32
    %c0_i32_1 = arith.constant 0 : i32
    return %c0_i32, %c0_i32_0 : i32, i32
  }
  func.func @transform_5(%arg0: i32) -> (i32, i32, i32) {
    %c0_i32 = arith.constant 0 : i32
    %c0_i32_0 = arith.constant 0 : i32
    %c0_i32_1 = arith.constant 0 : i32
    %c0_i32_2 = arith.constant 0 : i32
    return %c0_i32, %c0_i32_0, %c0_i32_1 : i32, i32, i32
  }
  func.func @transform_6(%arg0: i32) -> (i32, i32, i32) {
    %c0_i32 = arith.constant 0 : i32
    %c0_i32_0 = arith.constant 0 : i32
    %c0_i32_1 = arith.constant 0 : i32
    %c0_i32_2 = arith.constant 0 : i32
    return %c0_i32, %c0_i32_0, %c0_i32_1 : i32, i32, i32
  }
  func.func @transform_7(%arg0: i32) -> (i32, i32) {
    %c0_i32 = arith.constant 0 : i32
    %c0_i32_0 = arith.constant 0 : i32
    %c0_i32_1 = arith.constant 0 : i32
    return %c0_i32, %c0_i32_0 : i32, i32
  }
  func.func @transform_8(%arg0: i32) -> (i32, i32) {
    %c0_i32 = arith.constant 0 : i32
    %c0_i32_0 = arith.constant 0 : i32
    %c0_i32_1 = arith.constant 0 : i32
    return %c0_i32, %c0_i32_0 : i32, i32
  }
  func.func @transform_9(%arg0: i32) -> (i32, i32, i32) {
    %c0_i32 = arith.constant 0 : i32
    %c0_i32_0 = arith.constant 0 : i32
    %c0_i32_1 = arith.constant 0 : i32
    %c0_i32_2 = arith.constant 0 : i32
    return %c0_i32, %c0_i32_0, %c0_i32_1 : i32, i32, i32
  }
  func.func @transform_10(%arg0: i32) -> (i32, i32, i32) {
    %c0_i32 = arith.constant 0 : i32
    %c0_i32_0 = arith.constant 0 : i32
    %c0_i32_1 = arith.constant 0 : i32
    %c0_i32_2 = arith.constant 0 : i32
    return %c0_i32, %c0_i32_0, %c0_i32_1 : i32, i32, i32
  }
  func.func @transform_11(%arg0: i32) -> (i32, i32) {
    %c0_i32 = arith.constant 0 : i32
    %c0_i32_0 = arith.constant 0 : i32
    %c0_i32_1 = arith.constant 0 : i32
    return %c0_i32, %c0_i32_0 : i32, i32
  }
  func.func @transform_12(%arg0: i32) -> (i32, i32) {
    %c0_i32 = arith.constant 0 : i32
    %c0_i32_0 = arith.constant 0 : i32
    %c0_i32_1 = arith.constant 0 : i32
    return %c0_i32, %c0_i32_0 : i32, i32
  }
  func.func @transform_13(%arg0: i32) -> (i32, i32) {
    %c0_i32 = arith.constant 0 : i32
    %c0_i32_0 = arith.constant 0 : i32
    %c0_i32_1 = arith.constant 0 : i32
    return %c0_i32, %c0_i32_0 : i32, i32
  }
  func.func @transform_14(%arg0: i32) -> (i32, i32, i32) {
    %c0_i32 = arith.constant 0 : i32
    %c0_i32_0 = arith.constant 0 : i32
    %c0_i32_1 = arith.constant 0 : i32
    return %arg0, %c0_i32, %c0_i32_0 : i32, i32, i32
  }
}

</mosaic_0001>

<llo_original>
// kernel: tpu_custom_call.1
$region0: #{tpu_custom_call.1}
  #allocation0 [shape = 'u32[]', space=smem, size = 0x4, offset = 0x4, fixed_abs, tag = 'smem constant byte address 0x4 - core index']
  #allocation1 [shape = 'u32[144,128]{1,0:T(1,128)}', space=vmem, size = 0x12000, scoped, tag = 'internal scratch']
  #allocation2 [shape = 'f32[2,20,32]{2,1,0:T(8,128)}', space=vmem, size = 0x6000, scoped, tag = 'scratch operand']
  %s0 = inlined_call_operand.vmem [shape: bf16[32,20], index: 0, kind: input, shape index: {}]
  %s1 = inlined_call_operand.vmem [shape: bf16[32,4], index: 1, kind: input, shape index: {}]
  %s2 = inlined_call_operand.vmem [shape: f32[2,1,32], index: 2, kind: input, shape index: {}]
  %s3 = inlined_call_operand.vmem [shape: bf16[20,32], index: 3, kind: input, shape index: {}]
  %s4 = inlined_call_operand.vmem [shape: f32[1,32], index: 4, kind: input, shape index: {}]
  %s5 = inlined_call_operand.vmem [shape: f32[1,1,32], index: 5, kind: input, shape index: {}]
  %s6 = inlined_call_operand.vmem [shape: f32[1,1,32], index: 6, kind: input, shape index: {}]
  %s7 = inlined_call_operand.vmem [shape: bf16[160,32], index: 7, kind: input, shape index: {}]
  %s8 = inlined_call_operand.vmem [shape: f32[1,32], index: 8, kind: input, shape index: {}]
  %s9 = inlined_call_operand.vmem [shape: f32[1,1,32], index: 9, kind: input, shape index: {}]
  %s10 = inlined_call_operand.vmem [shape: f32[1,1,32], index: 10, kind: input, shape index: {}]
  %s11 = inlined_call_operand.vmem [shape: f32[32,32], index: 11, kind: input, shape index: {}]
  %s12 = inlined_call_operand.vmem [shape: bf16[4,32], index: 12, kind: input, shape index: {}]
  %s13 = inlined_call_operand.vmem [shape: f32[1,32], index: 13, kind: input, shape index: {}]
  %s14 = inlined_call_operand.hbm [shape: f32[2,16,32], index: 14, kind: output, shape index: {}]
  %s15 = sld [smem:[#allocation0]]
  $region66: #{tpu_custom_call.1} parent=0
    _
  %s17 = ssub.s32 1, %s15
  %s18 = scalar_select 0, %s17, %s15
  $region1: #{tpu_custom_call.1} parent=0
    #allocation3 [shape = 'u8[16384]{0}', space=vmem, size = 0x4000, scoped, tag = 'output window, operand 0, single buffered']
    #allocation4 [shape = 's32[1]{0}', space=sflag, size = 0x4, scoped, tag = 'scoped memory for tpu_custom_call.1']
    %19 = vsyncpa [#allocation4], 0
    // Predicated region
    $region2: #{tpu_custom_call.1} parent=1 // pred_check
      _
    $region3: #{tpu_custom_call.1} parent=1 // pred_check_branch
      %21 = sbr.rel (0) target = $region5
    $region4: #{tpu_custom_call.1} parent=1 // pred_region
      _
    $region5: #{tpu_custom_call.1} parent=1 // pred_fallthru
      _
    // Predicated region
    $region6: #{tpu_custom_call.1} parent=1 // pred_check
      _
    $region7: #{tpu_custom_call.1} parent=1 // pred_check_branch
      %23 = sbr.rel (0) target = $region9
    $region8: #{tpu_custom_call.1} parent=1 // pred_region
      _
    $region9: #{tpu_custom_call.1} parent=1 // pred_fallthru
      _
    // Predicated region
    $region10: #{tpu_custom_call.1} parent=1 // pred_check
      _
    $region11: #{tpu_custom_call.1} parent=1 // pred_check_branch
      %25 = sbr.rel (0) target = $region13
    $region12: #{tpu_custom_call.1} parent=1 // pred_region
      _
    $region13: #{tpu_custom_call.1} parent=1 // pred_fallthru
      _
    // Predicated region
    $region14: #{tpu_custom_call.1} parent=1 // pred_check
      _
    $region15: #{tpu_custom_call.1} parent=1 // pred_check_branch
      %27 = sbr.rel (0) target = $region17
    $region16: #{tpu_custom_call.1} parent=1 // pred_region
      _
    $region17: #{tpu_custom_call.1} parent=1 // pred_fallthru
      _
    // Predicated region
    $region18: #{tpu_custom_call.1} parent=1 // pred_check
      _
    $region19: #{tpu_custom_call.1} parent=1 // pred_check_branch
      %29 = sbr.rel (0) target = $region21
    $region20: #{tpu_custom_call.1} parent=1 // pred_region
      _
    $region21: #{tpu_custom_call.1} parent=1 // pred_fallthru
      _
    // Predicated region
    $region22: #{tpu_custom_call.1} parent=1 // pred_check
      _
    $region23: #{tpu_custom_call.1} parent=1 // pred_check_branch
      %31 = sbr.rel (0) target = $region25
    $region24: #{tpu_custom_call.1} parent=1 // pred_region
      _
    $region25: #{tpu_custom_call.1} parent=1 // pred_fallthru
      _
    // Predicated region
    $region26: #{tpu_custom_call.1} parent=1 // pred_check
      _
    $region27: #{tpu_custom_call.1} parent=1 // pred_check_branch
      %33 = sbr.rel (0) target = $region29
    $region28: #{tpu_custom_call.1} parent=1 // pred_region
      _
    $region29: #{tpu_custom_call.1} parent=1 // pred_fallthru
      _
    // Predicated region
    $region30: #{tpu_custom_call.1} parent=1 // pred_check
      _
    $region31: #{tpu_custom_call.1} parent=1 // pred_check_branch
      %35 = sbr.rel (0) target = $region33
    $region32: #{tpu_custom_call.1} parent=1 // pred_region
      _
    $region33: #{tpu_custom_call.1} parent=1 // pred_fallthru
      _
    // Predicated region
    $region34: #{tpu_custom_call.1} parent=1 // pred_check
      _
    $region35: #{tpu_custom_call.1} parent=1 // pred_check_branch
      %37 = sbr.rel (0) target = $region37
    $region36: #{tpu_custom_call.1} parent=1 // pred_region
      _
    $region37: #{tpu_custom_call.1} parent=1 // pred_fallthru
      _
    // Predicated region
    $region38: #{tpu_custom_call.1} parent=1 // pred_check
      _
    $region39: #{tpu_custom_call.1} parent=1 // pred_check_branch
      %39 = sbr.rel (0) target = $region41
    $region40: #{tpu_custom_call.1} parent=1 // pred_region
      _
    $region41: #{tpu_custom_call.1} parent=1 // pred_fallthru
      _
    // Predicated region
    $region42: #{tpu_custom_call.1} parent=1 // pred_check
      _
    $region43: #{tpu_custom_call.1} parent=1 // pred_check_branch
      %41 = sbr.rel (0) target = $region45
    $region44: #{tpu_custom_call.1} parent=1 // pred_region
      _
    $region45: #{tpu_custom_call.1} parent=1 // pred_fallthru
      _
    // Predicated region
    $region46: #{tpu_custom_call.1} parent=1 // pred_check
      _
    $region47: #{tpu_custom_call.1} parent=1 // pred_check_branch
      %43 = sbr.rel (0) target = $region49
    $region48: #{tpu_custom_call.1} parent=1 // pred_region
      _
    $region49: #{tpu_custom_call.1} parent=1 // pred_fallthru
      _
    // Predicated region
    $region50: #{tpu_custom_call.1} parent=1 // pred_check
      _
    $region51: #{tpu_custom_call.1} parent=1 // pred_check_branch
      %45 = sbr.rel (0) target = $region53
    $region52: #{tpu_custom_call.1} parent=1 // pred_region
      _
    $region53: #{tpu_custom_call.1} parent=1 // pred_fallthru
      _
    // Predicated region
    $region54: #{tpu_custom_call.1} parent=1 // pred_check
      _
    $region55: #{tpu_custom_call.1} parent=1 // pred_check_branch
      %47 = sbr.rel (0) target = $region57
    $region56: #{tpu_custom_call.1} parent=1 // pred_region
      _
    $region57: #{tpu_custom_call.1} parent=1 // pred_fallthru
      _
    %v49 = vld [vmem:[%s0] sm:$0xf]
    %v50 = vld [vmem:[%s0 + $0x4] sm:$0xf]
    %v51 = vld [vmem:[%s0 + $0x8] sm:$0xf]
    %v52 = vld [vmem:[%s0 + $0xc] sm:$0xf]
    %v53 = vld [vmem:[%s3] sm:$0xf]
    %v54 = vld [vmem:[%s3 + $0x4] sm:$0xf]
    %v55 = vld [vmem:[%s3 + $0x8] sm:$0x3]
    %v56 = vld [vmem:[%s4] sm:$0x1]
    %v58 = vlaneseq
    %v59 = vshrl.u32 %v58, 7
    %v60 = vsub.s32 0, %v59
    %v61 = vrot.slane %v56, %v60
    %v67 = vunpack.c.l.b16 %v49
    %v68 = vunpack.c.l.b16 %v50
    %v69 = vunpack.c.l.b16 %v51
    %v70 = vunpack.c.l.b16 %v52
    %v71 = vpack.c.b16 %v68, %v67
    %v72 = vpack.c.b16 %v70, %v69
    %v76 = vunpack.c.l.b16 %v53
    %v77 = vunpack.c.l.b16 %v54
    %v78 = vunpack.c.l.b16 %v55
    %v79 = vpack.c.b16 %v77, %v76
    %v80 = vpack.c.b16 %v78, %v78
    %vm82 = vcmask 162816
    %v84 = vsel %vm82, %v71, 0
    %v87 = vsel %vm82, %v72, 0
    %vm89 = vcmask 1041408
    %v91 = vsel %vm89, %v80, 0
    %93 = vmatprep.subr.bf16.mxu0 0
    %94 = vmatpush1.bf16.msra.mxu0 0
    %95 = vmatprep.subr.bf16.mxu0 0
    %96 = vmatpush1.bf16.msra.mxu0 0
    %97 = vmatprep.subr.bf16.mxu0 0
    %98 = vmatpush1.bf16.msra.mxu0 0
    %99 = vmatprep.subr.bf16.mxu0 0
    %100 = vmatpush1.bf16.msra.mxu0 0
    %101 = vmatprep.subr.bf16.mxu0 0
    %102 = vmatpush1.bf16.msra.mxu0 0
    %103 = vmatprep.subr.bf16.mxu0 0
    %104 = vmatpush1.bf16.msra.mxu0 0
    %105 = vmatprep.subr.bf16.mxu0 0
    %106 = vmatpush1.bf16.msra.mxu0 %v91
    %107 = vmatprep.subr.bf16.mxu0 0
    %108 = vmatpush1.bf16.msra.mxu0 %v79
    %109 = vmatprep.subr.bf16.mxu0 0
    %110 = vmatpush2.bf16.msra.mxu0 0
    %111 = vmatprep.subr.bf16.mxu0 0
    %112 = vmatpush2.bf16.msra.mxu0 0
    %113 = vmatprep.subr.bf16.mxu0 0
    %114 = vmatpush2.bf16.msra.mxu0 0
    %115 = vmatprep.subr.bf16.mxu0 0
    %116 = vmatpush2.bf16.msra.mxu0 0
    %117 = vmatprep.subr.bf16.mxu0 0
    %118 = vmatpush2.bf16.msra.mxu0 0
    %119 = vmatprep.subr.bf16.mxu0 0
    %120 = vmatpush2.bf16.msra.mxu0 0
    %121 = vmatprep.subr.bf16.mxu0 0
    %122 = vmatpush2.bf16.msra.mxu0 0
    %123 = vmatprep.subr.bf16.mxu0 0
    %124 = vmatpush2.bf16.msra.mxu0 0
    %125 = vmatprep.mubr.bf16.mxu0 0
    %126 = vmatmul.mubr.bf16.gmra.mxu0 %v84
    %v127 = vpop.f32.mrf.mxu0
    %v128 = vadd.f32 %v61, %v127
    %v129 = vpop.f32.mrf.mxu0
    %v130 = vpop.f32.mrf.mxu0
    %v131 = vadd.f32 %v61, %v130
    %v132 = vpop.f32.mrf.mxu0
    %133 = vmatprep.mubr.bf16.mxu0 0
    %134 = vmatmul.mubr.bf16.gmra.mxu0 %v87
    %v135 = vpop.f32.mrf.mxu0
    %v136 = vadd.f32 %v61, %v135
    %v137 = vpop.f32.mrf.mxu0
    %v138 = vpop.f32.mrf.mxu0
    %v139 = vadd.f32 %v61, %v138
    %v140 = vpop.f32.mrf.mxu0
    %141 = vdwg.mxu0
    %v142 = vld [vmem:[%s11] sm:$0xff]
    %v143 = vld [vmem:[%s11 + $0x8] sm:$0xff]
    %v144 = vld [vmem:[%s11 + $0x10] sm:$0xff]
    %v145 = vld [vmem:[%s11 + $0x18] sm:$0xff]
    %v146 = vld [vmem:[%s5] sm:$0x1]
    %v147 = vld [vmem:[%s6] sm:$0x1]
    %vm148 = vcmask 261120
    %v149 = vsel %vm148, %v128, 0.0
    %v150 = vsel %vm148, %v131, 0.0
    %v151 = vadd.f32 %v149, %v150
    %v152 = vrot.slane %v151, 4
    %v153 = vadd.f32 %v151, %v152
    %v154 = vrot.slane %v153, 2
    %v155 = vadd.f32 %v153, %v154
    %v156 = vrot.slane %v155, 1
    %v157 = vadd.f32 %v155, %v156
    %v158 = vsel %vm148, %v136, 0.0
    %v159 = vsel %vm148, %v139, 0.0
    %v160 = vadd.f32 %v158, %v159
    %v161 = vrot.slane %v160, 4
    %v162 = vadd.f32 %v160, %v161
    %v163 = vrot.slane %v162, 2
    %v164 = vadd.f32 %v162, %v163
    %v165 = vrot.slane %v164, 1
    %v166 = vadd.f32 %v164, %v165
    %vm169 = vcmask 1041409
    %v170 = vsel %vm169, %v166, %v157
    %v171 = vsel %vm148, %v170, 0
    %173 = vmatprep.subr.mxu0 0.0
    %174 = vmatpush1.msra.mxu0 0.0
    %175 = vmatprep.subr.mxu0 0.0
    %176 = vmatpush1.msra.mxu0 0.0
    %177 = vmatprep.subr.mxu0 0.0
    %178 = vmatpush1.msra.mxu0 0.0
    %179 = vmatprep.subr.mxu0 0.0
    %180 = vmatpush1.msra.mxu0 0.0
    %181 = vmatprep.subr.mxu0 0.0
    %182 = vmatpush1.msra.mxu0 0.0
    %183 = vmatprep.subr.mxu0 0.0
    %184 = vmatpush1.msra.mxu0 0.0
    %185 = vmatprep.subr.mxu0 0.0
    %186 = vmatpush1.msra.mxu0 0.0
    %187 = vmatprep.subr.mxu0 0.0
    %188 = vmatpush1.msra.mxu0 0.0
    %189 = vmatprep.subr.mxu0 0.0
    %190 = vmatpush1.msra.mxu0 0.0
    %191 = vmatprep.subr.mxu0 0.0
    %192 = vmatpush1.msra.mxu0 0.0
    %193 = vmatprep.subr.mxu0 0.0
    %194 = vmatpush1.msra.mxu0 0.0
    %195 = vmatprep.subr.mxu0 0.0
    %196 = vmatpush1.msra.mxu0 0.0
    %197 = vmatprep.subr.mxu0 0.0
    %198 = vmatpush1.msra.mxu0 %v145
    %199 = vmatprep.subr.mxu0 0.0
    %200 = vmatpush1.msra.mxu0 %v144
    %201 = vmatprep.subr.mxu0 0.0
    %202 = vmatpush1.msra.mxu0 %v143
    %203 = vmatprep.subr.mxu0 0.0
    %204 = vmatpush1.msra.mxu0 %v142
    %205 = vmatprep.subr.mxu0 0.0
    %206 = vmatpush2.msra.mxu0 0.0
    %207 = vmatprep.subr.mxu0 0.0
    %208 = vmatpush2.msra.mxu0 0.0
    %209 = vmatprep.subr.mxu0 0.0
    %210 = vmatpush2.msra.mxu0 0.0
    %211 = vmatprep.subr.mxu0 0.0
    %212 = vmatpush2.msra.mxu0 0.0
    %213 = vmatprep.subr.mxu0 0.0
    %214 = vmatpush2.msra.mxu0 0.0
    %215 = vmatprep.subr.mxu0 0.0
    %216 = vmatpush2.msra.mxu0 0.0
    %217 = vmatprep.subr.mxu0 0.0
    %218 = vmatpush2.msra.mxu0 0.0
    %219 = vmatprep.subr.mxu0 0.0
    %220 = vmatpush2.msra.mxu0 0.0
    %221 = vmatprep.subr.mxu0 0.0
    %222 = vmatpush2.msra.mxu0 0.0
    %223 = vmatprep.subr.mxu0 0.0
    %224 = vmatpush2.msra.mxu0 0.0
    %225 = vmatprep.subr.mxu0 0.0
    %226 = vmatpush2.msra.mxu0 0.0
    %227 = vmatprep.subr.mxu0 0.0
    %228 = vmatpush2.msra.mxu0 0.0
    %229 = vmatprep.subr.mxu0 0.0
    %230 = vmatpush2.msra.mxu0 0.0
    %231 = vmatprep.subr.mxu0 0.0
    %232 = vmatpush2.msra.mxu0 0.0
    %233 = vmatprep.subr.mxu0 0.0
    %234 = vmatpush2.msra.mxu0 0.0
    %235 = vmatprep.subr.mxu0 0.0
    %236 = vmatpush2.msra.mxu0 0.0
    %237 = vmatprep.mubr.f32.mxu0 0.0
    %238 = vmatmul.mubr.f32.gmra.mxu0 %v171
    %v239 = vpop.f32.mrf.mxu0
    %v240 = vadd.f32 0.0, %v239
    %v241 = vpop.f32.mrf.mxu0
    %242 = vdwg.mxu0
    %v245 = vunpack.c.l.s4 1966171168
    %v246 = vunpack.c.0.s8 %v245
    %v247 = vlaneseq
    %v248 = vshrl.u32 %v247, 7
    %v249 = vsub.s32 %v246, %v248
    %v250 = vrot.slane %v240, %v249
    %v251 = vcombine.high %v250, %v250
    %v253 = vunpack.c.l.s4 1966171168
    %v254 = vunpack.c.0.s8 %v253
    %v255 = vlaneseq
    %v256 = vshrl.u32 %v255, 7
    %v257 = vsub.s32 %v254, %v256
    %v258 = vrot.slane %v250, %v257
    %v260 = vunpack.c.l.s4 1966171168
    %v261 = vunpack.c.0.s8 %v260
    %v262 = vlaneseq
    %v263 = vshrl.u32 %v262, 7
    %v264 = vsub.s32 %v261, %v263
    %v265 = vrot.slane %v251, %v264
    %v266 = vlaneseq
    %v267 = vshrl.u32 %v266, 7
    %v268 = vsub.s32 0, %v267
    %v269 = vrot.slane %v258, %v268
    %v270 = vlaneseq
    %v271 = vshrl.u32 %v270, 7
    %v272 = vsub.s32 0, %v271
    %v273 = vrot.slane %v265, %v272
    %v276 = vsub.f32 %v128, %v269
    %v277 = vsub.f32 %v131, %v269
    %v278 = vsub.f32 %v136, %v273
    %v279 = vsub.f32 %v139, %v273
    %v280 = vmul.f32 %v276, %v276
    %v281 = vmul.f32 %v277, %v277
    %v282 = vmul.f32 %v278, %v278
    %v283 = vmul.f32 %v279, %v279
    %v284 = vsel %vm148, %v280, 0.0
    %v285 = vsel %vm148, %v281, 0.0
    %v286 = vadd.f32 %v284, %v285
    %v287 = vrot.slane %v286, 4
    %v288 = vadd.f32 %v286, %v287
    %v289 = vrot.slane %v288, 2
    %v290 = vadd.f32 %v288, %v289
    %v291 = vrot.slane %v290, 1
    %v292 = vadd.f32 %v290, %v291
    %v293 = vsel %vm148, %v282, 0.0
    %v294 = vsel %vm148, %v283, 0.0
    %v295 = vadd.f32 %v293, %v294
    %v296 = vrot.slane %v295, 4
    %v297 = vadd.f32 %v295, %v296
    %v298 = vrot.slane %v297, 2
    %v299 = vadd.f32 %v297, %v298
    %v300 = vrot.slane %v299, 1
    %v301 = vadd.f32 %v299, %v300
    %v304 = vsel %vm169, %v301, %v292
    %v305 = vsel %vm148, %v304, 0
    %307 = vmatprep.subr.mxu0 0.0
    %308 = vmatpush1.msra.mxu0 0.0
    %309 = vmatprep.subr.mxu0 0.0
    %310 = vmatpush1.msra.mxu0 0.0
    %311 = vmatprep.subr.mxu0 0.0
    %312 = vmatpush1.msra.mxu0 0.0
    %313 = vmatprep.subr.mxu0 0.0
    %314 = vmatpush1.msra.mxu0 0.0
    %315 = vmatprep.subr.mxu0 0.0
    %316 = vmatpush1.msra.mxu0 0.0
    %317 = vmatprep.subr.mxu0 0.0
    %318 = vmatpush1.msra.mxu0 0.0
    %319 = vmatprep.subr.mxu0 0.0
    %320 = vmatpush1.msra.mxu0 0.0
    %321 = vmatprep.subr.mxu0 0.0
    %322 = vmatpush1.msra.mxu0 0.0
    %323 = vmatprep.subr.mxu0 0.0
    %324 = vmatpush1.msra.mxu0 0.0
    %325 = vmatprep.subr.mxu0 0.0
    %326 = vmatpush1.msra.mxu0 0.0
    %327 = vmatprep.subr.mxu0 0.0
    %328 = vmatpush1.msra.mxu0 0.0
    %329 = vmatprep.subr.mxu0 0.0
    %330 = vmatpush1.msra.mxu0 0.0
    %331 = vmatprep.subr.mxu0 0.0
    %332 = vmatpush1.msra.mxu0 %v145
    %333 = vmatprep.subr.mxu0 0.0
    %334 = vmatpush1.msra.mxu0 %v144
    %335 = vmatprep.subr.mxu0 0.0
    %336 = vmatpush1.msra.mxu0 %v143
    %337 = vmatprep.subr.mxu0 0.0
    %338 = vmatpush1.msra.mxu0 %v142
    %339 = vmatprep.subr.mxu0 0.0
    %340 = vmatpush2.msra.mxu0 0.0
    %341 = vmatprep.subr.mxu0 0.0
    %342 = vmatpush2.msra.mxu0 0.0
    %343 = vmatprep.subr.mxu0 0.0
    %344 = vmatpush2.msra.mxu0 0.0
    %345 = vmatprep.subr.mxu0 0.0
    %346 = vmatpush2.msra.mxu0 0.0
    %347 = vmatprep.subr.mxu0 0.0
    %348 = vmatpush2.msra.mxu0 0.0
    %349 = vmatprep.subr.mxu0 0.0
    %350 = vmatpush2.msra.mxu0 0.0
    %351 = vmatprep.subr.mxu0 0.0
    %352 = vmatpush2.msra.mxu0 0.0
    %353 = vmatprep.subr.mxu0 0.0
    %354 = vmatpush2.msra.mxu0 0.0
    %355 = vmatprep.subr.mxu0 0.0
    %356 = vmatpush2.msra.mxu0 0.0
    %357 = vmatprep.subr.mxu0 0.0
    %358 = vmatpush2.msra.mxu0 0.0
    %359 = vmatprep.subr.mxu0 0.0
    %360 = vmatpush2.msra.mxu0 0.0
    %361 = vmatprep.subr.mxu0 0.0
    %362 = vmatpush2.msra.mxu0 0.0
    %363 = vmatprep.subr.mxu0 0.0
    %364 = vmatpush2.msra.mxu0 0.0
    %365 = vmatprep.subr.mxu0 0.0
    %366 = vmatpush2.msra.mxu0 0.0
    %367 = vmatprep.subr.mxu0 0.0
    %368 = vmatpush2.msra.mxu0 0.0
    %369 = vmatprep.subr.mxu0 0.0
    %370 = vmatpush2.msra.mxu0 0.0
    %371 = vmatprep.mubr.f32.mxu0 0.0
    %372 = vmatmul.mubr.f32.gmra.mxu0 %v305
    %v373 = vpop.f32.mrf.mxu0
    %v374 = vadd.f32 1e-05, %v373
    %v375 = vpop.f32.mrf.mxu0
    %376 = vdwg.mxu0
    %v377 = vrsqrt.pop %v374
    %v380 = vunpack.c.l.s4 1966171168
    %v381 = vunpack.c.0.s8 %v380
    %v382 = vlaneseq
    %v383 = vshrl.u32 %v382, 7
    %v384 = vsub.s32 %v381, %v383
    %v385 = vrot.slane %v377, %v384
    %v386 = vcombine.high %v385, %v385
    %v388 = vunpack.c.l.s4 1966171168
    %v389 = vunpack.c.0.s8 %v388
    %v390 = vlaneseq
    %v391 = vshrl.u32 %v390, 7
    %v392 = vsub.s32 %v389, %v391
    %v393 = vrot.slane %v385, %v392
    %v395 = vunpack.c.l.s4 1966171168
    %v396 = vunpack.c.0.s8 %v395
    %v397 = vlaneseq
    %v398 = vshrl.u32 %v397, 7
    %v399 = vsub.s32 %v396, %v398
    %v400 = vrot.slane %v386, %v399
    %v401 = vlaneseq
    %v402 = vshrl.u32 %v401, 7
    %v403 = vsub.s32 0, %v402
    %v404 = vrot.slane %v393, %v403
    %v405 = vlaneseq
    %v406 = vshrl.u32 %v405, 7
    %v407 = vsub.s32 0, %v406
    %v408 = vrot.slane %v400, %v407
    %v411 = vmul.f32 %v276, %v404
    %v412 = vmul.f32 %v277, %v404
    %v413 = vmul.f32 %v278, %v408
    %v414 = vmul.f32 %v279, %v408
    %v416 = vlaneseq
    %v417 = vshrl.u32 %v416, 7
    %v418 = vsub.s32 0, %v417
    %v419 = vrot.slane %v146, %v418
    %v421 = vmul.f32 %v411, %v419
    %v422 = vmul.f32 %v412, %v419
    %v423 = vmul.f32 %v413, %v419
    %v424 = vmul.f32 %v414, %v419
    %v426 = vlaneseq
    %v427 = vshrl.u32 %v426, 7
    %v428 = vsub.s32 0, %v427
    %v429 = vrot.slane %v147, %v428
    %v431 = vadd.f32 %v421, %v429
    %v432 = vadd.f32 %v422, %v429
    %v433 = vadd.f32 %v423, %v429
    %v434 = vadd.f32 %v424, %v429
    %v435 = vmin.f32 %v431, 20.0
    %v436 = vmin.f32 %v432, 20.0
    %v437 = vmin.f32 %v433, 20.0
    %v438 = vmin.f32 %v434, 20.0
    %v439 = vmul.f32 %v435, 1.442695
    %v440 = vpow.pop %v439
    %v441 = vmul.f32 %v436, 1.442695
    %v442 = vpow.pop %v441
    %v443 = vmul.f32 %v437, 1.442695
    %v444 = vpow.pop %v443
    %v445 = vmul.f32 %v438, 1.442695
    %v446 = vpow.pop %v445
    %v447 = vadd.f32 %v440, 2.0
    %v448 = vadd.f32 %v442, 2.0
    %v449 = vadd.f32 %v444, 2.0
    %v450 = vadd.f32 %v446, 2.0
    %v451 = vmul.f32 %v440, %v447
    %v452 = vmul.f32 %v442, %v448
    %v453 = vmul.f32 %v444, %v449
    %v454 = vmul.f32 %v446, %v450
    %v455 = vmul.f32 %v431, %v451
    %v456 = vmul.f32 %v432, %v452
    %v457 = vmul.f32 %v433, %v453
    %v458 = vmul.f32 %v434, %v454
    %v459 = vadd.f32 %v451, 2.0
    %v460 = vadd.f32 %v452, 2.0
    %v461 = vadd.f32 %v453, 2.0
    %v462 = vadd.f32 %v454, 2.0
    %v463 = vrcp.pop %v459
    %v464 = vrcp.pop %v460
    %v465 = vrcp.pop %v461
    %v466 = vrcp.pop %v462
    %v467 = vmul.f32 %v455, %v463
    %v468 = vmul.f32 %v456, %v464
    %v469 = vmul.f32 %v457, %v465
    %v470 = vmul.f32 %v458, %v466
    %v471 = vld [vmem:[%s2] sm:$0x1]
    %v472 = vld [vmem:[%s2 + $0x1] sm:$0x1]
    %v475 = vlaneseq
    %v476 = vshrl.u32 %v475, 7
    %v477 = vsub.s32 0, %v476
    %v478 = vrot.slane %v471, %v477
    %v479 = vlaneseq
    %v480 = vshrl.u32 %v479, 7
    %v481 = vsub.s32 0, %v480
    %v482 = vrot.slane %v472, %v481
    %v485 = vadd.f32 %v467, %v478
    %v486 = vadd.f32 %v468, %v478
    %v487 = vadd.f32 %v469, %v482
    %v488 = vadd.f32 %v470, %v482
    %vm489 = vcmask 254976
    %490 = vst.msk [vmem:[#allocation2] sm:$0x3] %vm489, 0.0
    %491 = vst.msk [vmem:[#allocation2 + $0x18] sm:$0x3] %vm489, 0.0
    %492 = vst.msk [vmem:[#allocation2 + $0x12] sm:$0x3] %vm489, 0.0
    %493 = vst.msk [vmem:[#allocation2 + $0x2a] sm:$0x3] %vm489, 0.0
    %494 = vst.msk [vmem:[#allocation2 + $0x2] sm:$0xff] %vm148, %v485
    %495 = vst.msk [vmem:[#allocation2 + $0xa] sm:$0xff] %vm148, %v486
    %496 = vst.msk [vmem:[#allocation2 + $0x1a] sm:$0xff] %vm148, %v487
    %497 = vst.msk [vmem:[#allocation2 + $0x22] sm:$0xff] %vm148, %v488
    %v498 = vld [vmem:[#allocation2] sm:$0xff]
    %v499 = vld [vmem:[#allocation2 + $0x8] sm:$0xff]
    %v500 = vld [vmem:[#allocation2 + $0x18] sm:$0xff]
    %v501 = vld [vmem:[#allocation2 + $0x20] sm:$0xff]
    %v502 = vld [vmem:[#allocation2 + $0x1] sm:$0xff]
    %v503 = vld [vmem:[#allocation2 + $0x9] sm:$0xff]
    %v504 = vld [vmem:[#allocation2 + $0x19] sm:$0xff]
    %v505 = vld [vmem:[#allocation2 + $0x21] sm:$0xff]
    %v506 = vld [vmem:[#allocation2 + $0x2] sm:$0xff]
    %v507 = vld [vmem:[#allocation2 + $0xa] sm:$0xff]
    %v508 = vld [vmem:[#allocation2 + $0x1a] sm:$0xff]
    %v509 = vld [vmem:[#allocation2 + $0x22] sm:$0xff]
    %v510 = vld [vmem:[#allocation2 + $0x3] sm:$0xff]
    %v511 = vld [vmem:[#allocation2 + $0xb] sm:$0xff]
    %v512 = vld [vmem:[#allocation2 + $0x1b] sm:$0xff]
    %v513 = vld [vmem:[#allocation2 + $0x23] sm:$0xff]
    %v514 = vld [vmem:[#allocation2 + $0x4] sm:$0xff]
    %v515 = vld [vmem:[#allocation2 + $0xc] sm:$0xff]
    %v516 = vld [vmem:[#allocation2 + $0x1c] sm:$0xff]
    %v517 = vld [vmem:[#allocation2 + $0x24] sm:$0xff]
    %522 = vrot.lane.b32.xlu0 %v502, 32
    %v523 = vpop.permute.xlu0 %522
    %524 = vrot.lane.b32.xlu0 %v503, 32
    %v525 = vpop.permute.xlu0 %524
    %526 = vrot.lane.b32.xlu0 %v504, 32
    %v527 = vpop.permute.xlu0 %526
    %528 = vrot.lane.b32.xlu0 %v505, 32
    %v529 = vpop.permute.xlu0 %528
    %538 = vrot.lane.b32.xlu0 %v506, 64
    %v539 = vpop.permute.xlu0 %538
    %540 = vrot.lane.b32.xlu0 %v507, 64
    %v541 = vpop.permute.xlu0 %540
    %542 = vrot.lane.b32.xlu0 %v508, 64
    %v543 = vpop.permute.xlu0 %542
    %544 = vrot.lane.b32.xlu0 %v509, 64
    %v545 = vpop.permute.xlu0 %544
    %554 = vrot.lane.b32.xlu0 %v510, 96
    %v555 = vpop.permute.xlu0 %554
    %556 = vrot.lane.b32.xlu0 %v511, 96
    %v557 = vpop.permute.xlu0 %556
    %558 = vrot.lane.b32.xlu0 %v512, 96
    %v559 = vpop.permute.xlu0 %558
    %560 = vrot.lane.b32.xlu0 %v513, 96
    %v561 = vpop.permute.xlu0 %560
    %v566 = vsel %vm148, %v498, %v523
    %v567 = vsel %vm148, %v499, %v525
    %v568 = vsel %vm148, %v500, %v527
    %v569 = vsel %vm148, %v501, %v529
    %vm570 = vcmask 523264
    %v571 = vsel %vm570, %v566, %v539
    %v572 = vsel %vm570, %v567, %v541
    %v573 = vsel %vm570, %v568, %v543
    %v574 = vsel %vm570, %v569, %v545
    %vm575 = vcmask 785408
    %v576 = vsel %vm575, %v571, %v555
    %v577 = vsel %vm575, %v572, %v557
    %v578 = vsel %vm575, %v573, %v559
    %v579 = vsel %vm575, %v574, %v561
    %v580 = vpack.c.bf16 %v577, %v576
    %v581 = vpack.c.bf16 %v515, %v514
    %v582 = vpack.c.bf16 %v579, %v578
    %v583 = vpack.c.bf16 %v517, %v516
    %v584 = vld [vmem:[%s7] sm:$0xf]
    %v585 = vld [vmem:[%s7 + $0x4] sm:$0xf]
    %v586 = vld [vmem:[%s7 + $0x8] sm:$0xf]
    %v587 = vld [vmem:[%s7 + $0xc] sm:$0xf]
    %v588 = vld [vmem:[%s7 + $0x10] sm:$0xf]
    %v589 = vld [vmem:[%s7 + $0x14] sm:$0xf]
    %v590 = vld [vmem:[%s7 + $0x18] sm:$0xf]
    %v591 = vld [vmem:[%s7 + $0x1c] sm:$0xf]
    %v592 = vld [vmem:[%s7 + $0x20] sm:$0xf]
    %v593 = vld [vmem:[%s7 + $0x24] sm:$0xf]
    %v594 = vld [vmem:[%s7 + $0x28] sm:$0xf]
    %v595 = vld [vmem:[%s7 + $0x2c] sm:$0xf]
    %v596 = vld [vmem:[%s7 + $0x30] sm:$0xf]
    %v597 = vld [vmem:[%s7 + $0x34] sm:$0xf]
    %v598 = vld [vmem:[%s7 + $0x38] sm:$0xf]
    %v599 = vld [vmem:[%s7 + $0x3c] sm:$0xf]
    %v600 = vld [vmem:[%s7 + $0x40] sm:$0xf]
    %v601 = vld [vmem:[%s7 + $0x44] sm:$0xf]
    %v602 = vld [vmem:[%s7 + $0x48] sm:$0xf]
    %v603 = vld [vmem:[%s7 + $0x4c] sm:$0xf]
    %v604 = vld [vmem:[%s8] sm:$0x1]
    %v606 = vlaneseq
    %v607 = vshrl.u32 %v606, 7
    %v608 = vsub.s32 0, %v607
    %v609 = vrot.slane %v604, %v608
    %v631 = vunpack.c.l.b16 %v584
    %v632 = vunpack.c.l.b16 %v585
    %v633 = vunpack.c.l.b16 %v586
    %v634 = vunpack.c.l.b16 %v587
    %v635 = vunpack.c.l.b16 %v588
    %v636 = vunpack.c.l.b16 %v589
    %v637 = vunpack.c.l.b16 %v590
    %v638 = vunpack.c.l.b16 %v591
    %v639 = vunpack.c.l.b16 %v592
    %v640 = vunpack.c.l.b16 %v593
    %v641 = vunpack.c.l.b16 %v594
    %v642 = vunpack.c.l.b16 %v595
    %v643 = vunpack.c.l.b16 %v596
    %v644 = vunpack.c.l.b16 %v597
    %v645 = vunpack.c.l.b16 %v598
    %v646 = vunpack.c.l.b16 %v599
    %v647 = vunpack.c.l.b16 %v600
    %v648 = vunpack.c.l.b16 %v601
    %v649 = vunpack.c.l.b16 %v602
    %v650 = vunpack.c.l.b16 %v603
    %v651 = vpack.c.b16 %v632, %v631
    %v652 = vpack.c.b16 %v634, %v633
    %v653 = vpack.c.b16 %v636, %v635
    %v654 = vpack.c.b16 %v638, %v637
    %v655 = vpack.c.b16 %v640, %v639
    %v656 = vpack.c.b16 %v642, %v641
    %v657 = vpack.c.b16 %v644, %v643
    %v658 = vpack.c.b16 %v646, %v645
    %v659 = vpack.c.b16 %v648, %v647
    %v660 = vpack.c.b16 %v650, %v649
    %v672 = vsel %vm148, %v581, 0
    %v675 = vsel %vm148, %v583, 0
    %677 = vmatprep.subr.bf16.mxu0 0
    %678 = vmatpush1.bf16.msra.mxu0 %v658
    %679 = vmatprep.subr.bf16.mxu0 0
    %680 = vmatpush1.bf16.msra.mxu0 %v657
    %681 = vmatprep.subr.bf16.mxu0 0
    %682 = vmatpush1.bf16.msra.mxu0 %v656
    %683 = vmatprep.subr.bf16.mxu0 0
    %684 = vmatpush1.bf16.msra.mxu0 %v655
    %685 = vmatprep.subr.bf16.mxu0 0
    %686 = vmatpush1.bf16.msra.mxu0 %v654
    %687 = vmatprep.subr.bf16.mxu0 0
    %688 = vmatpush1.bf16.msra.mxu0 %v653
    %689 = vmatprep.subr.bf16.mxu0 0
    %690 = vmatpush1.bf16.msra.mxu0 %v652
    %691 = vmatprep.subr.bf16.mxu0 0
    %692 = vmatpush1.bf16.msra.mxu0 %v651
    %693 = vmatprep.subr.bf16.mxu0 0
    %694 = vmatpush2.bf16.msra.mxu0 0
    %695 = vmatprep.subr.bf16.mxu0 0
    %696 = vmatpush2.bf16.msra.mxu0 0
    %697 = vmatprep.subr.bf16.mxu0 0
    %698 = vmatpush2.bf16.msra.mxu0 0
    %699 = vmatprep.subr.bf16.mxu0 0
    %700 = vmatpush2.bf16.msra.mxu0 0
    %701 = vmatprep.subr.bf16.mxu0 0
    %702 = vmatpush2.bf16.msra.mxu0 0
    %703 = vmatprep.subr.bf16.mxu0 0
    %704 = vmatpush2.bf16.msra.mxu0 0
    %705 = vmatprep.subr.bf16.mxu0 0
    %706 = vmatpush2.bf16.msra.mxu0 %v660
    %707 = vmatprep.subr.bf16.mxu0 0
    %708 = vmatpush2.bf16.msra.mxu0 %v659
    %709 = vmatprep.mubr.bf16.mxu0 %v672
    %710 = vmatmul.mubr.bf16.gmra.mxu0 %v580
    %v711 = vpop.f32.mrf.mxu0
    %v712 = vadd.f32 %v609, %v711
    %v713 = vpop.f32.mrf.mxu0
    %v714 = vpop.f32.mrf.mxu0
    %v715 = vadd.f32 %v609, %v714
    %v716 = vpop.f32.mrf.mxu0
    %717 = vmatprep.mubr.bf16.mxu0 %v675
    %718 = vmatmul.mubr.bf16.gmra.mxu0 %v582
    %v719 = vpop.f32.mrf.mxu0
    %v720 = vadd.f32 %v609, %v719
    %v721 = vpop.f32.mrf.mxu0
    %v722 = vpop.f32.mrf.mxu0
    %v723 = vadd.f32 %v609, %v722
    %v724 = vpop.f32.mrf.mxu0
    %725 = vdwg.mxu0
    %v726 = vld [vmem:[%s11] sm:$0xff]
    %v727 = vld [vmem:[%s11 + $0x8] sm:$0xff]
    %v728 = vld [vmem:[%s11 + $0x10] sm:$0xff]
    %v729 = vld [vmem:[%s11 + $0x18] sm:$0xff]
    %v730 = vld [vmem:[%s9] sm:$0x1]
    %v731 = vld [vmem:[%s10] sm:$0x1]
    %v732 = vsel %vm148, %v712, 0.0
    %v733 = vsel %vm148, %v715, 0.0
    %v734 = vadd.f32 %v732, %v733
    %v735 = vrot.slane %v734, 4
    %v736 = vadd.f32 %v734, %v735
    %v737 = vrot.slane %v736, 2
    %v738 = vadd.f32 %v736, %v737
    %v739 = vrot.slane %v738, 1
    %v740 = vadd.f32 %v738, %v739
    %v741 = vsel %vm148, %v720, 0.0
    %v742 = vsel %vm148, %v723, 0.0
    %v743 = vadd.f32 %v741, %v742
    %v744 = vrot.slane %v743, 4
    %v745 = vadd.f32 %v743, %v744
    %v746 = vrot.slane %v745, 2
    %v747 = vadd.f32 %v745, %v746
    %v748 = vrot.slane %v747, 1
    %v749 = vadd.f32 %v747, %v748
    %v752 = vsel %vm169, %v749, %v740
    %v753 = vsel %vm148, %v752, 0
    %755 = vmatprep.subr.mxu0 0.0
    %756 = vmatpush1.msra.mxu0 0.0
    %757 = vmatprep.subr.mxu0 0.0
    %758 = vmatpush1.msra.mxu0 0.0
    %759 = vmatprep.subr.mxu0 0.0
    %760 = vmatpush1.msra.mxu0 0.0
    %761 = vmatprep.subr.mxu0 0.0
    %762 = vmatpush1.msra.mxu0 0.0
    %763 = vmatprep.subr.mxu0 0.0
    %764 = vmatpush1.msra.mxu0 0.0
    %765 = vmatprep.subr.mxu0 0.0
    %766 = vmatpush1.msra.mxu0 0.0
    %767 = vmatprep.subr.mxu0 0.0
    %768 = vmatpush1.msra.mxu0 0.0
    %769 = vmatprep.subr.mxu0 0.0
    %770 = vmatpush1.msra.mxu0 0.0
    %771 = vmatprep.subr.mxu0 0.0
    %772 = vmatpush1.msra.mxu0 0.0
    %773 = vmatprep.subr.mxu0 0.0
    %774 = vmatpush1.msra.mxu0 0.0
    %775 = vmatprep.subr.mxu0 0.0
    %776 = vmatpush1.msra.mxu0 0.0
    %777 = vmatprep.subr.mxu0 0.0
    %778 = vmatpush1.msra.mxu0 0.0
    %779 = vmatprep.subr.mxu0 0.0
    %780 = vmatpush1.msra.mxu0 %v729
    %781 = vmatprep.subr.mxu0 0.0
    %782 = vmatpush1.msra.mxu0 %v728
    %783 = vmatprep.subr.mxu0 0.0
    %784 = vmatpush1.msra.mxu0 %v727
    %785 = vmatprep.subr.mxu0 0.0
    %786 = vmatpush1.msra.mxu0 %v726
    %787 = vmatprep.subr.mxu0 0.0
    %788 = vmatpush2.msra.mxu0 0.0
    %789 = vmatprep.subr.mxu0 0.0
    %790 = vmatpush2.msra.mxu0 0.0
    %791 = vmatprep.subr.mxu0 0.0
    %792 = vmatpush2.msra.mxu0 0.0
    %793 = vmatprep.subr.mxu0 0.0
    %794 = vmatpush2.msra.mxu0 0.0
    %795 = vmatprep.subr.mxu0 0.0
    %796 = vmatpush2.msra.mxu0 0.0
    %797 = vmatprep.subr.mxu0 0.0
    %798 = vmatpush2.msra.mxu0 0.0
    %799 = vmatprep.subr.mxu0 0.0
    %800 = vmatpush2.msra.mxu0 0.0
    %801 = vmatprep.subr.mxu0 0.0
    %802 = vmatpush2.msra.mxu0 0.0
    %803 = vmatprep.subr.mxu0 0.0
    %804 = vmatpush2.msra.mxu0 0.0
    %805 = vmatprep.subr.mxu0 0.0
    %806 = vmatpush2.msra.mxu0 0.0
    %807 = vmatprep.subr.mxu0 0.0
    %808 = vmatpush2.msra.mxu0 0.0
    %809 = vmatprep.subr.mxu0 0.0
    %810 = vmatpush2.msra.mxu0 0.0
    %811 = vmatprep.subr.mxu0 0.0
    %812 = vmatpush2.msra.mxu0 0.0
    %813 = vmatprep.subr.mxu0 0.0
    %814 = vmatpush2.msra.mxu0 0.0
    %815 = vmatprep.subr.mxu0 0.0
    %816 = vmatpush2.msra.mxu0 0.0
    %817 = vmatprep.subr.mxu0 0.0
    %818 = vmatpush2.msra.mxu0 0.0
    %819 = vmatprep.mubr.f32.mxu0 0.0
    %820 = vmatmul.mubr.f32.gmra.mxu0 %v753
    %v821 = vpop.f32.mrf.mxu0
    %v822 = vadd.f32 0.0, %v821
    %v823 = vpop.f32.mrf.mxu0
    %824 = vdwg.mxu0
    %v827 = vunpack.c.l.s4 1966171168
    %v828 = vunpack.c.0.s8 %v827
    %v829 = vlaneseq
    %v830 = vshrl.u32 %v829, 7
    %v831 = vsub.s32 %v828, %v830
    %v832 = vrot.slane %v822, %v831
    %v833 = vcombine.high %v832, %v832
    %v835 = vunpack.c.l.s4 1966171168
    %v836 = vunpack.c.0.s8 %v835
    %v837 = vlaneseq
    %v838 = vshrl.u32 %v837, 7
    %v839 = vsub.s32 %v836, %v838
    %v840 = vrot.slane %v832, %v839
    %v842 = vunpack.c.l.s4 1966171168
    %v843 = vunpack.c.0.s8 %v842
    %v844 = vlaneseq
    %v845 = vshrl.u32 %v844, 7
    %v846 = vsub.s32 %v843, %v845
    %v847 = vrot.slane %v833, %v846
    %v848 = vlaneseq
    %v849 = vshrl.u32 %v848, 7
    %v850 = vsub.s32 0, %v849
    %v851 = vrot.slane %v840, %v850
    %v852 = vlaneseq
    %v853 = vshrl.u32 %v852, 7
    %v854 = vsub.s32 0, %v853
    %v855 = vrot.slane %v847, %v854
    %v858 = vsub.f32 %v712, %v851
    %v859 = vsub.f32 %v715, %v851
    %v860 = vsub.f32 %v720, %v855
    %v861 = vsub.f32 %v723, %v855
    %v862 = vmul.f32 %v858, %v858
    %v863 = vmul.f32 %v859, %v859
    %v864 = vmul.f32 %v860, %v860
    %v865 = vmul.f32 %v861, %v861
    %v866 = vsel %vm148, %v862, 0.0
    %v867 = vsel %vm148, %v863, 0.0
    %v868 = vadd.f32 %v866, %v867
    %v869 = vrot.slane %v868, 4
    %v870 = vadd.f32 %v868, %v869
    %v871 = vrot.slane %v870, 2
    %v872 = vadd.f32 %v870, %v871
    %v873 = vrot.slane %v872, 1
    %v874 = vadd.f32 %v872, %v873
    %v875 = vsel %vm148, %v864, 0.0
    %v876 = vsel %vm148, %v865, 0.0
    %v877 = vadd.f32 %v875, %v876
    %v878 = vrot.slane %v877, 4
    %v879 = vadd.f32 %v877, %v878
    %v880 = vrot.slane %v879, 2
    %v881 = vadd.f32 %v879, %v880
    %v882 = vrot.slane %v881, 1
    %v883 = vadd.f32 %v881, %v882
    %v886 = vsel %vm169, %v883, %v874
    %v887 = vsel %vm148, %v886, 0
    %889 = vmatprep.subr.mxu0 0.0
    %890 = vmatpush1.msra.mxu0 0.0
    %891 = vmatprep.subr.mxu0 0.0
    %892 = vmatpush1.msra.mxu0 0.0
    %893 = vmatprep.subr.mxu0 0.0
    %894 = vmatpush1.msra.mxu0 0.0
    %895 = vmatprep.subr.mxu0 0.0
    %896 = vmatpush1.msra.mxu0 0.0
    %897 = vmatprep.subr.mxu0 0.0
    %898 = vmatpush1.msra.mxu0 0.0
    %899 = vmatprep.subr.mxu0 0.0
    %900 = vmatpush1.msra.mxu0 0.0
    %901 = vmatprep.subr.mxu0 0.0
    %902 = vmatpush1.msra.mxu0 0.0
    %903 = vmatprep.subr.mxu0 0.0
    %904 = vmatpush1.msra.mxu0 0.0
    %905 = vmatprep.subr.mxu0 0.0
    %906 = vmatpush1.msra.mxu0 0.0
    %907 = vmatprep.subr.mxu0 0.0
    %908 = vmatpush1.msra.mxu0 0.0
    %909 = vmatprep.subr.mxu0 0.0
    %910 = vmatpush1.msra.mxu0 0.0
    %911 = vmatprep.subr.mxu0 0.0
    %912 = vmatpush1.msra.mxu0 0.0
    %913 = vmatprep.subr.mxu0 0.0
    %914 = vmatpush1.msra.mxu0 %v729
    %915 = vmatprep.subr.mxu0 0.0
    %916 = vmatpush1.msra.mxu0 %v728
    %917 = vmatprep.subr.mxu0 0.0
    %918 = vmatpush1.msra.mxu0 %v727
    %919 = vmatprep.subr.mxu0 0.0
    %920 = vmatpush1.msra.mxu0 %v726
    %921 = vmatprep.subr.mxu0 0.0
    %922 = vmatpush2.msra.mxu0 0.0
    %923 = vmatprep.subr.mxu0 0.0
    %924 = vmatpush2.msra.mxu0 0.0
    %925 = vmatprep.subr.mxu0 0.0
    %926 = vmatpush2.msra.mxu0 0.0
    %927 = vmatprep.subr.mxu0 0.0
    %928 = vmatpush2.msra.mxu0 0.0
    %929 = vmatprep.subr.mxu0 0.0
    %930 = vmatpush2.msra.mxu0 0.0
    %931 = vmatprep.subr.mxu0 0.0
    %932 = vmatpush2.msra.mxu0 0.0
    %933 = vmatprep.subr.mxu0 0.0
    %934 = vmatpush2.msra.mxu0 0.0
    %935 = vmatprep.subr.mxu0 0.0
    %936 = vmatpush2.msra.mxu0 0.0
    %937 = vmatprep.subr.mxu0 0.0
    %938 = vmatpush2.msra.mxu0 0.0
    %939 = vmatprep.subr.mxu0 0.0
    %940 = vmatpush2.msra.mxu0 0.0
    %941 = vmatprep.subr.mxu0 0.0
    %942 = vmatpush2.msra.mxu0 0.0
    %943 = vmatprep.subr.mxu0 0.0
    %944 = vmatpush2.msra.mxu0 0.0
    %945 = vmatprep.subr.mxu0 0.0
    %946 = vmatpush2.msra.mxu0 0.0
    %947 = vmatprep.subr.mxu0 0.0
    %948 = vmatpush2.msra.mxu0 0.0
    %949 = vmatprep.subr.mxu0 0.0
    %950 = vmatpush2.msra.mxu0 0.0
    %951 = vmatprep.subr.mxu0 0.0
    %952 = vmatpush2.msra.mxu0 0.0
    %953 = vmatprep.mubr.f32.mxu0 0.0
    %954 = vmatmul.mubr.f32.gmra.mxu0 %v887
    %v955 = vpop.f32.mrf.mxu0
    %v956 = vadd.f32 1e-05, %v955
    %v957 = vpop.f32.mrf.mxu0
    %958 = vdwg.mxu0
    %v959 = vrsqrt.pop %v956
    %v962 = vunpack.c.l.s4 1966171168
    %v963 = vunpack.c.0.s8 %v962
    %v964 = vlaneseq
    %v965 = vshrl.u32 %v964, 7
    %v966 = vsub.s32 %v963, %v965
    %v967 = vrot.slane %v959, %v966
    %v968 = vcombine.high %v967, %v967
    %v970 = vunpack.c.l.s4 1966171168
    %v971 = vunpack.c.0.s8 %v970
    %v972 = vlaneseq
    %v973 = vshrl.u32 %v972, 7
    %v974 = vsub.s32 %v971, %v973
    %v975 = vrot.slane %v967, %v974
    %v977 = vunpack.c.l.s4 1966171168
    %v978 = vunpack.c.0.s8 %v977
    %v979 = vlaneseq
    %v980 = vshrl.u32 %v979, 7
    %v981 = vsub.s32 %v978, %v980
    %v982 = vrot.slane %v968, %v981
    %v983 = vlaneseq
    %v984 = vshrl.u32 %v983, 7
    %v985 = vsub.s32 0, %v984
    %v986 = vrot.slane %v975, %v985
    %v987 = vlaneseq
    %v988 = vshrl.u32 %v987, 7
    %v989 = vsub.s32 0, %v988
    %v990 = vrot.slane %v982, %v989
    %v993 = vmul.f32 %v858, %v986
    %v994 = vmul.f32 %v859, %v986
    %v995 = vmul.f32 %v860, %v990
    %v996 = vmul.f32 %v861, %v990
    %v998 = vlaneseq
    %v999 = vshrl.u32 %v998, 7
    %v1000 = vsub.s32 0, %v999
    %v1001 = vrot.slane %v730, %v1000
    %v1003 = vmul.f32 %v993, %v1001
    %v1004 = vmul.f32 %v994, %v1001
    %v1005 = vmul.f32 %v995, %v1001
    %v1006 = vmul.f32 %v996, %v1001
    %v1008 = vlaneseq
    %v1009 = vshrl.u32 %v1008, 7
    %v1010 = vsub.s32 0, %v1009
    %v1011 = vrot.slane %v731, %v1010
    %v1013 = vadd.f32 %v1003, %v1011
    %v1014 = vadd.f32 %v1004, %v1011
    %v1015 = vadd.f32 %v1005, %v1011
    %v1016 = vadd.f32 %v1006, %v1011
    %v1017 = vmin.f32 %v1013, 20.0
    %v1018 = vmin.f32 %v1014, 20.0
    %v1019 = vmin.f32 %v1015, 20.0
    %v1020 = vmin.f32 %v1016, 20.0
    %v1021 = vmul.f32 %v1017, 1.442695
    %v1022 = vpow.pop %v1021
    %v1023 = vmul.f32 %v1018, 1.442695
    %v1024 = vpow.pop %v1023
    %v1025 = vmul.f32 %v1019, 1.442695
    %v1026 = vpow.pop %v1025
    %v1027 = vmul.f32 %v1020, 1.442695
    %v1028 = vpow.pop %v1027
    %v1029 = vadd.f32 %v1022, 2.0
    %v1030 = vadd.f32 %v1024, 2.0
    %v1031 = vadd.f32 %v1026, 2.0
    %v1032 = vadd.f32 %v1028, 2.0
    %v1033 = vmul.f32 %v1022, %v1029
    %v1034 = vmul.f32 %v1024, %v1030
    %v1035 = vmul.f32 %v1026, %v1031
    %v1036 = vmul.f32 %v1028, %v1032
    %v1037 = vmul.f32 %v1013, %v1033
    %v1038 = vmul.f32 %v1014, %v1034
    %v1039 = vmul.f32 %v1015, %v1035
    %v1040 = vmul.f32 %v1016, %v1036
    %v1041 = vadd.f32 %v1033, 2.0
    %v1042 = vadd.f32 %v1034, 2.0
    %v1043 = vadd.f32 %v1035, 2.0
    %v1044 = vadd.f32 %v1036, 2.0
    %v1045 = vrcp.pop %v1041
    %v1046 = vrcp.pop %v1042
    %v1047 = vrcp.pop %v1043
    %v1048 = vrcp.pop %v1044
    %v1049 = vmul.f32 %v1037, %v1045
    %v1050 = vmul.f32 %v1038, %v1046
    %v1051 = vmul.f32 %v1039, %v1047
    %v1052 = vmul.f32 %v1040, %v1048
    %v1053 = vld [vmem:[%s1] sm:$0xf]
    %v1054 = vld [vmem:[%s1 + $0x4] sm:$0xf]
    %v1055 = vld [vmem:[%s1 + $0x8] sm:$0xf]
    %v1056 = vld [vmem:[%s1 + $0xc] sm:$0xf]
    %v1057 = vld [vmem:[%s12] sm:$0x3]
    %v1058 = vld [vmem:[%s13] sm:$0x1]
    %v1060 = vlaneseq
    %v1061 = vshrl.u32 %v1060, 7
    %v1062 = vsub.s32 0, %v1061
    %v1063 = vrot.slane %v1058, %v1062
    %v1069 = vunpack.c.l.b16 %v1053
    %v1070 = vunpack.c.l.b16 %v1054
    %v1071 = vunpack.c.l.b16 %v1055
    %v1072 = vunpack.c.l.b16 %v1056
    %v1073 = vpack.c.b16 %v1070, %v1069
    %v1074 = vpack.c.b16 %v1072, %v1071
    %vm1075 = vcmask 31744
    %v1077 = vsel %vm1075, %v1073, 0
    %v1080 = vsel %vm1075, %v1074, 0
    %v1083 = vsel %vm89, %v1057, 0
    %1085 = vmatprep.subr.bf16.mxu0 0
    %1086 = vmatpush1.bf16.msra.mxu0 0
    %1087 = vmatprep.subr.bf16.mxu0 0
    %1088 = vmatpush1.bf16.msra.mxu0 0
    %1089 = vmatprep.subr.bf16.mxu0 0
    %1090 = vmatpush1.bf16.msra.mxu0 0
    %1091 = vmatprep.subr.bf16.mxu0 0
    %1092 = vmatpush1.bf16.msra.mxu0 0
    %1093 = vmatprep.subr.bf16.mxu0 0
    %1094 = vmatpush1.bf16.msra.mxu0 0
    %1095 = vmatprep.subr.bf16.mxu0 0
    %1096 = vmatpush1.bf16.msra.mxu0 0
    %1097 = vmatprep.subr.bf16.mxu0 0
    %1098 = vmatpush1.bf16.msra.mxu0 0
    %1099 = vmatprep.subr.bf16.mxu0 0
    %1100 = vmatpush1.bf16.msra.mxu0 %v1083
    %1101 = vmatprep.subr.bf16.mxu0 0
    %1102 = vmatpush2.bf16.msra.mxu0 0
    %1103 = vmatprep.subr.bf16.mxu0 0
    %1104 = vmatpush2.bf16.msra.mxu0 0
    %1105 = vmatprep.subr.bf16.mxu0 0
    %1106 = vmatpush2.bf16.msra.mxu0 0
    %1107 = vmatprep.subr.bf16.mxu0 0
    %1108 = vmatpush2.bf16.msra.mxu0 0
    %1109 = vmatprep.subr.bf16.mxu0 0
    %1110 = vmatpush2.bf16.msra.mxu0 0
    %1111 = vmatprep.subr.bf16.mxu0 0
    %1112 = vmatpush2.bf16.msra.mxu0 0
    %1113 = vmatprep.subr.bf16.mxu0 0
    %1114 = vmatpush2.bf16.msra.mxu0 0
    %1115 = vmatprep.subr.bf16.mxu0 0
    %1116 = vmatpush2.bf16.msra.mxu0 0
    %1117 = vmatprep.mubr.bf16.mxu0 0
    %1118 = vmatmul.mubr.bf16.gmra.mxu0 %v1077
    %v1119 = vpop.f32.mrf.mxu0
    %v1120 = vadd.f32 %v1063, %v1119
    %v1121 = vpop.f32.mrf.mxu0
    %v1122 = vpop.f32.mrf.mxu0
    %v1123 = vadd.f32 %v1063, %v1122
    %v1124 = vpop.f32.mrf.mxu0
    %1125 = vmatprep.mubr.bf16.mxu0 0
    %1126 = vmatmul.mubr.bf16.gmra.mxu0 %v1080
    %v1127 = vpop.f32.mrf.mxu0
    %v1128 = vadd.f32 %v1063, %v1127
    %v1129 = vpop.f32.mrf.mxu0
    %v1130 = vpop.f32.mrf.mxu0
    %v1131 = vadd.f32 %v1063, %v1130
    %v1132 = vpop.f32.mrf.mxu0
    %1133 = vdwg.mxu0
    %v1134 = vadd.f32 %v1049, %v1120
    %v1135 = vadd.f32 %v1050, %v1123
    %v1136 = vadd.f32 %v1051, %v1128
    %v1137 = vadd.f32 %v1052, %v1131
    %1138 = vst.msk [vmem:[#allocation3] sm:$0xff] %vm148, %v1134
    %1139 = vst.msk [vmem:[#allocation3 + $0x8] sm:$0xff] %vm148, %v1135
    %1140 = vst.msk [vmem:[#allocation3 + $0x10] sm:$0xff] %vm148, %v1136
    %1141 = vst.msk [vmem:[#allocation3 + $0x18] sm:$0xff] %vm148, %v1137
    // Predicated region
    $region58: #{tpu_custom_call.1} parent=1 // pred_check
      _
    $region59: #{tpu_custom_call.1} parent=1 // pred_check_branch
      %1143 = sbr.rel (0) target = $region61
    $region60: #{tpu_custom_call.1} parent=1 // pred_region
      %s1145 = ssub.s32 512, 512
      %1146 = vsyncadd [#allocation4], %s1145
      %s1147 = sshll.u32 [#allocation3], 4
      %s1148 = int_to_ptr.vmem [resolvable:$true] %s1147
      %1153 = dma.vmem_to_hbm [thread:$0]  %s1148, 512, %s14, [#allocation4], 128, 128, 8
    $region61: #{tpu_custom_call.1} parent=1 // pred_fallthru
      _
    // Predicated region
    $region62: #{tpu_custom_call.1} parent=1 // pred_check
      _
    $region63: #{tpu_custom_call.1} parent=1 // pred_check_branch
      %1155 = sbr.rel (0) target = $region65
    $region64: #{tpu_custom_call.1} parent=1 // pred_region
      %1156 = dma.done [#allocation4], 512
    $region65: #{tpu_custom_call.1} parent=1 // pred_fallthru
      _
    %1157 = vsyncpa [#allocation4], 1

</llo_original>
